<compile_context>
chip_gen: v7x
topology: tpu7x:2x2x1
jax: 0.10.0
libtpu: 0.0.40
codegen_flags: <defaults>
</compile_context>

<pallas_src>
import functools
import numpy as np
import jax
import jax.numpy as jnp
from jax.experimental import pallas as pl
from jax.experimental.pallas import tpu as pltpu

BN_EPS = 1e-5
LANE = 128
TM_CAP = 1024                     # spatial row-band cap (rows per band, multiple of 8)
VMEM_LIMIT = 48 * 1024 * 1024     # explicit scoped-VMEM budget (fits v5e/v6e/v7x)


def _round_up(x, m):
    return (x + m - 1) // m * m


def _cpad(c):
    """Padded channel count (multiple of 128)."""
    return max(LANE, _round_up(c, LANE))


def _ctile(c):
    """Channel tile for a padded channel count (prefers one deep tile, e.g. 768 for 728-ch)."""
    for t in (768, 512, 384, 256, 128):
        if c % t == 0:
            return t
    return 128


def _tm_split(mtot, p):
    """Split the batch-folded spatial axis into nb bands of TM rows (TM >= halo P, mult of 8)."""
    cap = max(TM_CAP, _round_up(max(p, 8), 8))
    if mtot <= cap:
        return 1, _round_up(mtot, 8)
    nb = max(1, mtot // cap)            # floor -> TM >= cap >= P (halo fits in one band)
    tm = _round_up(-(-mtot // nb), 8)
    nb = -(-mtot // tm)
    return nb, tm


# ---------------------------------------------------------------------------
# In-kernel helpers
# ---------------------------------------------------------------------------

def _edge_masks(tm, H, W, dil):
    """Row/column validity masks, computed ONCE per invocation (hoisted out of the tap loop)."""
    base = pl.program_id(0) * tm
    r = base + jax.lax.broadcasted_iota(jnp.int32, (tm, 1), 0)   # global flat row index
    yg = r // W
    c = r - yg * W                                               # column within image
    y = yg % H                                                   # row within image
    rm, rp = y >= dil, y < (H - dil)
    cm, cp = c >= dil, c < (W - dil)
    masks = {}
    for dy in (-1, 0, 1):
        for dx in (-1, 0, 1):
            m = None
            if dy != 0:
                m = rm if dy < 0 else rp
            if dx != 0:
                mc = cm if dx < 0 else cp
                m = mc if m is None else jnp.logical_and(m, mc)
            masks[(dy, dx)] = m
    return masks


def _fill_stitch(xx_ref, top_ref, x_ref, bot_ref, Pr, TM, relu):
    """Stitch [top halo | band | bottom halo] into a VMEM scratch; apply input ReLU once."""
    t, m, b = top_ref[0], x_ref[...], bot_ref[0]
    if relu:
        t, m, b = jnp.maximum(t, 0), jnp.maximum(m, 0), jnp.maximum(b, 0)
    xx_ref[0:Pr, :] = t
    xx_ref[Pr:Pr + TM, :] = m
    xx_ref[Pr + TM:Pr + TM + Pr, :] = b


# ---------------------------------------------------------------------------
# Pallas kernels
# ---------------------------------------------------------------------------

def _conv1x1_kernel(x_ref, w_ref, s_ref, b_ref, o_ref, acc_ref, *, out_relu):
    """1x1 conv (plain matmul) with fused eval-BN (+ReLU)."""
    k = pl.program_id(2)

    @pl.when(k == 0)
    def _():
        acc_ref[...] = jnp.zeros_like(acc_ref)

    acc_ref[...] += jnp.dot(x_ref[...], w_ref[0], preferred_element_type=jnp.float32)

    @pl.when(k == pl.num_programs(2) - 1)
    def _():
        y = acc_ref[...] * s_ref[...] + b_ref[...]
        if out_relu:
            y = jnp.maximum(y, 0.0)
        o_ref[...] = y.astype(o_ref.dtype)


def _conv3_kernel(x_ref, top_ref, bot_ref, w_ref, s_ref, b_ref, o_ref,
                  acc_ref, xx_ref, *, TM, H, W, dil, Pr, out_relu):
    """Dense 3x3 (dilated) conv: 9 shifted MXU matmuls on a halo-stitched band, fused BN(+ReLU)."""
    k = pl.program_id(2)

    @pl.when(k == 0)
    def _():
        acc_ref[...] = jnp.zeros_like(acc_ref)

    _fill_stitch(xx_ref, top_ref, x_ref, bot_ref, Pr, TM, False)
    masks = _edge_masks(TM, H, W, dil)

    part = jnp.zeros(acc_ref.shape, jnp.float32)
    for kh in range(3):
        for kw in range(3):
            dy, dx = kh - 1, kw - 1
            off = Pr + (dy * W + dx) * dil
            tap = xx_ref[off:off + TM, :]
            m = masks[(dy, dx)]
            if m is not None:
                tap = jnp.where(m, tap, jnp.zeros_like(tap))
            part = part + jnp.dot(tap, w_ref[kh * 3 + kw],
                                  preferred_element_type=jnp.float32)
    acc_ref[...] += part

    @pl.when(k == pl.num_programs(2) - 1)
    def _():
        y = acc_ref[...] * s_ref[...] + b_ref[...]
        if out_relu:
            y = jnp.maximum(y, 0.0)
        o_ref[...] = y.astype(o_ref.dtype)


def _sep_kernel(*refs, TM, H, W, dil, Pr, in_relu, out_relu, has_res):
    """Fused SeparableConv2d: depthwise 3x3 (bf16 VPU, f32 accum) -> 1x1 MXU -> BN(+res)(+ReLU)."""
    if has_res:
        (x_ref, top_ref, bot_ref, dw_ref, pw_ref, s_ref, b_ref, r_ref,
         o_ref, acc_ref, xx_ref) = refs
    else:
        (x_ref, top_ref, bot_ref, dw_ref, pw_ref, s_ref, b_ref,
         o_ref, acc_ref, xx_ref) = refs
        r_ref = None
    k = pl.program_id(2)

    @pl.when(k == 0)
    def _():
        acc_ref[...] = jnp.zeros_like(acc_ref)

    _fill_stitch(xx_ref, top_ref, x_ref, bot_ref, Pr, TM, in_relu)   # ReLU applied once here
    masks = _edge_masks(TM, H, W, dil)

    dw_acc = jnp.zeros((TM, x_ref.shape[1]), jnp.float32)
    for kh in range(3):
        for kw in range(3):
            dy, dx = kh - 1, kw - 1
            off = Pr + (dy * W + dx) * dil
            prod = xx_ref[off:off + TM, :] * dw_ref[kh * 3 + kw:kh * 3 + kw + 1, :]  # bf16 mul
            m = masks[(dy, dx)]
            if m is not None:
                prod = jnp.where(m, prod, jnp.zeros_like(prod))
            dw_acc = dw_acc + prod                                   # f32 accumulation

    acc_ref[...] += jnp.dot(dw_acc.astype(jnp.bfloat16), pw_ref[...],
                            preferred_element_type=jnp.float32)

    @pl.when(k == pl.num_programs(2) - 1)
    def _():
        y = acc_ref[...] * s_ref[...] + b_ref[...]
        if has_res:
            y = y + r_ref[...].astype(jnp.float32)
        if out_relu:
            y = jnp.maximum(y, 0.0)
        o_ref[...] = y.astype(o_ref.dtype)


# ---------------------------------------------------------------------------
# Halo construction (tiny side arrays; replaces the old full-activation jnp.pad)
# ---------------------------------------------------------------------------

def _make_halos(x2d, nb, TM, P, Pr):
    C = x2d.shape[1]
    dt = x2d.dtype
    if nb == 1:
        z = jnp.zeros((1, Pr, C), dt)
        return z, z
    xb = x2d.reshape(nb, TM, C)
    zero = jnp.zeros((1, P, C), dt)
    top = jnp.concatenate([zero, xb[:-1, TM - P:, :]], axis=0)       # last P rows of prev band
    bot = jnp.concatenate([xb[1:, :P, :], zero], axis=0)             # first P rows of next band
    top = jnp.pad(top, ((0, 0), (Pr - P, 0), (0, 0)))                # real rows at the END
    bot = jnp.pad(bot, ((0, 0), (0, Pr - P), (0, 0)))                # real rows at the START
    return top, bot


# ---------------------------------------------------------------------------
# Kernel-call wrappers (jitted; shapes/static flags cached)
# ---------------------------------------------------------------------------

@functools.partial(jax.jit, static_argnames=("H", "W", "dil", "relu"))
def _conv_call(x2d, w, scale, bias, *, H, W, dil, relu):
    """x2d: (N*H*W, Cin_pad) bf16; w: (KK, Cin_pad, Cout_pad) bf16.  Stride-1 'same' conv."""
    Mtot, Cin = x2d.shape
    KK, _, Cout = w.shape
    TK, TN = _ctile(Cin), _ctile(Cout)
    scale2, bias2 = scale.reshape(1, Cout), bias.reshape(1, Cout)
    cparams = pltpu.CompilerParams(
        dimension_semantics=("parallel", "parallel", "arbitrary"),
        vmem_limit_bytes=VMEM_LIMIT)

    if KK == 1:
        nb, TM = _tm_split(Mtot, 0)
        Mt = nb * TM
        if Mt != Mtot:
            x2d = jnp.pad(x2d, ((0, Mt - Mtot), (0, 0)))
        out = pl.pallas_call(
            functools.partial(_conv1x1_kernel, out_relu=relu),
            out_shape=jax.ShapeDtypeStruct((Mt, Cout), jnp.bfloat16),
            grid_spec=pltpu.PrefetchScalarGridSpec(
                num_scalar_prefetch=0,
                grid=(nb, Cout // TN, Cin // TK),
                in_specs=[
                    pl.BlockSpec((TM, TK), lambda m, j, k: (m, k)),
                    pl.BlockSpec((1, TK, TN), lambda m, j, k: (0, k, j)),
                    pl.BlockSpec((1, TN), lambda m, j, k: (0, j)),
                    pl.BlockSpec((1, TN), lambda m, j, k: (0, j)),
                ],
                out_specs=pl.BlockSpec((TM, TN), lambda m, j, k: (m, j)),
                scratch_shapes=[pltpu.VMEM((TM, TN), jnp.float32)]),
            compiler_params=cparams,
        )(x2d, w, scale2, bias2)
    else:
        P = dil * (W + 1)
        Pr = _round_up(P, 8)
        nb, TM = _tm_split(Mtot, P)
        Mt = nb * TM
        if Mt != Mtot:
            x2d = jnp.pad(x2d, ((0, Mt - Mtot), (0, 0)))
        top, bot = _make_halos(x2d, nb, TM, P, Pr)
        out = pl.pallas_call(
            functools.partial(_conv3_kernel, TM=TM, H=H, W=W, dil=dil, Pr=Pr, out_relu=relu),
            out_shape=jax.ShapeDtypeStruct((Mt, Cout), jnp.bfloat16),
            grid_spec=pltpu.PrefetchScalarGridSpec(
                num_scalar_prefetch=0,
                grid=(nb, Cout // TN, Cin // TK),
                in_specs=[
                    pl.BlockSpec((TM, TK), lambda m, j, k: (m, k)),
                    pl.BlockSpec((1, Pr, TK), lambda m, j, k: (m, 0, k)),
                    pl.BlockSpec((1, Pr, TK), lambda m, j, k: (m, 0, k)),
                    pl.BlockSpec((9, TK, TN), lambda m, j, k: (0, k, j)),
                    pl.BlockSpec((1, TN), lambda m, j, k: (0, j)),
                    pl.BlockSpec((1, TN), lambda m, j, k: (0, j)),
                ],
                out_specs=pl.BlockSpec((TM, TN), lambda m, j, k: (m, j)),
                scratch_shapes=[pltpu.VMEM((TM, TN), jnp.float32),
                                pltpu.VMEM((TM + 2 * Pr, TK), jnp.bfloat16)]),
            compiler_params=cparams,
        )(x2d, top, bot, w, scale2, bias2)
    return out if Mt == Mtot else out[:Mtot]


@functools.partial(jax.jit, static_argnames=("H", "W", "dil", "in_relu", "out_relu"))
def _sep_conv_call(x2d, dw, pw, scale, bias, residual, *, H, W, dil, in_relu, out_relu):
    """Fused separable conv on the batch-folded flat activation (stride 1)."""
    Mtot, Cin = x2d.shape
    Cout = pw.shape[1]
    TK, TN = _ctile(Cin), _ctile(Cout)
    P = dil * (W + 1)
    Pr = _round_up(P, 8)
    nb, TM = _tm_split(Mtot, P)
    Mt = nb * TM
    if Mt != Mtot:
        x2d = jnp.pad(x2d, ((0, Mt - Mtot), (0, 0)))
        if residual is not None:
            residual = jnp.pad(residual, ((0, Mt - Mtot), (0, 0)))
    top, bot = _make_halos(x2d, nb, TM, P, Pr)
    has_res = residual is not None

    args = [x2d, top, bot, dw, pw, scale.reshape(1, Cout), bias.reshape(1, Cout)]
    in_specs = [
        pl.BlockSpec((TM, TK), lambda m, j, k: (m, k)),
        pl.BlockSpec((1, Pr, TK), lambda m, j, k: (m, 0, k)),
        pl.BlockSpec((1, Pr, TK), lambda m, j, k: (m, 0, k)),
        pl.BlockSpec((9, TK), lambda m, j, k: (0, k)),
        pl.BlockSpec((TK, TN), lambda m, j, k: (k, j)),
        pl.BlockSpec((1, TN), lambda m, j, k: (0, j)),
        pl.BlockSpec((1, TN), lambda m, j, k: (0, j)),
    ]
    if has_res:
        args.append(residual)
        in_specs.append(pl.BlockSpec((TM, TN), lambda m, j, k: (m, j)))

    out = pl.pallas_call(
        functools.partial(_sep_kernel, TM=TM, H=H, W=W, dil=dil, Pr=Pr,
                          in_relu=in_relu, out_relu=out_relu, has_res=has_res),
        out_shape=jax.ShapeDtypeStruct((Mt, Cout), jnp.bfloat16),
        grid_spec=pltpu.PrefetchScalarGridSpec(
            num_scalar_prefetch=0,
            grid=(nb, Cout // TN, Cin // TK),
            in_specs=in_specs,
            out_specs=pl.BlockSpec((TM, TN), lambda m, j, k: (m, j)),
            scratch_shapes=[pltpu.VMEM((TM, TN), jnp.float32),
                            pltpu.VMEM((TM + 2 * Pr, TK), jnp.bfloat16)]),
        compiler_params=pltpu.CompilerParams(
            dimension_semantics=("parallel", "parallel", "arbitrary"),
            vmem_limit_bytes=VMEM_LIMIT),
    )(*args)
    return out if Mt == Mtot else out[:Mtot]


# ---------------------------------------------------------------------------
# Layer-level wrappers (activations stay NHWC, channel-padded, bf16)
# ---------------------------------------------------------------------------

def conv_bn(x, p, *, relu):
    """Conv2d(bias=False) + eval-mode BatchNorm (+ReLU)."""
    stride = p["stride"]
    ksize = 3 if p["w"].shape[0] == 9 else 1
    if stride != 1 and ksize == 1:
        x = x[:, ::stride, ::stride, :]          # 1x1 stride-s == subsample then 1x1
    N, H, W, C = x.shape
    y = _conv_call(x.reshape(N * H * W, C), p["w"], p["scale"], p["bias"],
                   H=H, W=W, dil=p["dil"], relu=relu)
    y = y.reshape(N, H, W, -1)
    if stride != 1 and ksize == 3:
        y = y[:, ::stride, ::stride, :]
    return y


def conv1_forward(p, x):
    """Stem conv: stride-2 outputs only, 9 taps x 3 channels packed into one K=27 matmul."""
    N, H, W, _ = x.shape
    Ho, Wo = (H - 1) // 2 + 1, (W - 1) // 2 + 1
    xp = jnp.pad(x, ((0, 0), (1, 1), (1, 1), (0, 0)))
    taps = [xp[:, kh:kh + 2 * Ho:2, kw:kw + 2 * Wo:2, :] for kh in range(3) for kw in range(3)]
    col = jnp.concatenate(taps, axis=-1)                             # (N, Ho, Wo, 27)
    col = jnp.pad(col, ((0, 0), (0, 0), (0, 0), (0, LANE - 27)))
    y = _conv_call(col.reshape(N * Ho * Wo, LANE), p["w"], p["scale"], p["bias"],
                   H=Ho, W=Wo, dil=1, relu=True)
    return y.reshape(N, Ho, Wo, -1)


def separable_conv(x, sep, bn, *, in_relu, out_relu=False, residual=None):
    stride, dil = sep["stride"], sep["dilation"]
    N, H, W, C = x.shape
    if stride != 1:
        assert residual is None and not out_relu
    res2d = residual.reshape(N * H * W, -1) if residual is not None else None
    y = _sep_conv_call(x.reshape(N * H * W, C), sep["dw"], sep["pw"],
                       bn["scale"], bn["bias"], res2d,
                       H=H, W=W, dil=dil, in_relu=in_relu, out_relu=out_relu)
    y = y.reshape(N, H, W, -1)
    if stride != 1:
        y = y[:, ::stride, ::stride, :]          # stride-s 'same' conv == stride-1 + subsample
    return y


def interpolate_bilinear(x, out_h, out_w):
    """F.interpolate(mode='bilinear', align_corners=True) glue.  Returns f32."""
    N, H, W, C = x.shape

    def coords(In, Out):
        if Out == 1 or In == 1:
            pos = jnp.zeros((Out,), jnp.float32)
        else:
            pos = jnp.arange(Out, dtype=jnp.float32) * ((In - 1) / (Out - 1))
        lo = jnp.clip(jnp.floor(pos).astype(jnp.int32), 0, In - 1)
        hi = jnp.clip(lo + 1, 0, In - 1)
        frac = pos - lo.astype(jnp.float32)
        return lo, hi, frac

    h0, h1, fh = coords(H, out_h)
    w0, w1, fw = coords(W, out_w)
    xf = x.astype(jnp.float32)
    xh = xf[:, h0] * (1 - fh)[None, :, None, None] + xf[:, h1] * fh[None, :, None, None]
    return xh[:, :, w0] * (1 - fw)[None, None, :, None] + xh[:, :, w1] * fw[None, None, :, None]


# ---------------------------------------------------------------------------
# Deterministic parameter construction (synthetic weights; eval-mode BN; pre-padded)
# ---------------------------------------------------------------------------

def make_bn(c):
    cp = _cpad(c)
    gamma, beta = np.ones(c, np.float32), np.zeros(c, np.float32)
    mean, var = np.zeros(c, np.float32), np.ones(c, np.float32)
    scale = gamma / np.sqrt(var + BN_EPS)
    bias = beta - mean * scale
    sp, bp = np.zeros(cp, np.float32), np.zeros(cp, np.float32)
    sp[:c], bp[:c] = scale, bias
    return dict(scale=jnp.asarray(sp), bias=jnp.asarray(bp))


def make_conv_w(rng, cin, cout, ksize):
    """Dense conv weight in tap-major (KK, Cin_pad, Cout_pad) bf16 layout (zero-padded)."""
    w = rng.standard_normal((cout, cin, ksize, ksize)).astype(np.float32) / np.sqrt(cin * ksize * ksize)
    cip, cop = _cpad(cin), _cpad(cout)
    wt = np.zeros((ksize * ksize, cip, cop), np.float32)
    wt[:, :cin, :cout] = np.transpose(w, (2, 3, 1, 0)).reshape(ksize * ksize, cin, cout)
    return jnp.asarray(wt, dtype=jnp.bfloat16)


def make_convbn(rng, cin, cout, ksize, stride=1, dil=1):
    return dict(w=make_conv_w(rng, cin, cout, ksize), stride=stride, dil=dil, **make_bn(cout))


def make_conv1(rng):
    """Stem conv weight packed as a single K=27 (padded to 128) pointwise matmul."""
    cout = 32
    cop = _cpad(cout)
    w = rng.standard_normal((cout, 3, 3, 3)).astype(np.float32) / np.sqrt(27.0)
    wt = np.zeros((1, LANE, cop), np.float32)
    wt[0, :27, :cout] = np.transpose(w, (2, 3, 1, 0)).reshape(27, cout)   # (kh,kw,cin) major
    return dict(w=jnp.asarray(wt, jnp.bfloat16), stride=2, dil=1, **make_bn(cout))


def make_sep(rng, cin, cout, stride, dilation):
    cip, cop = _cpad(cin), _cpad(cout)
    dw = rng.standard_normal((cin, 1, 3, 3)).astype(np.float32) / 3.0
    dwp = np.zeros((9, cip), np.float32)
    dwp[:, :cin] = np.transpose(dw[:, 0], (1, 2, 0)).reshape(9, cin)
    pw = rng.standard_normal((cout, cin, 1, 1)).astype(np.float32) / np.sqrt(cin)
    pwp = np.zeros((cip, cop), np.float32)
    pwp[:cin, :cout] = pw.reshape(cout, cin).T
    return dict(dw=jnp.asarray(dwp, dtype=jnp.bfloat16),
                pw=jnp.asarray(pwp, dtype=jnp.bfloat16),
                stride=stride, dilation=dilation)


def make_block(rng, inplanes, planes, reps, stride=1, dilation=1,
               start_with_relu=True, grow_first=True, is_last=False):
    rep = []   # list of [pre_relu, sep_params, bn_params]
    filters = inplanes
    if grow_first:
        rep.append([True, make_sep(rng, inplanes, planes, 1, dilation), make_bn(planes)])
        filters = planes
    for _ in range(reps - 1):
        rep.append([True, make_sep(rng, filters, filters, 1, dilation), make_bn(filters)])
    if not grow_first:
        rep.append([True, make_sep(rng, inplanes, planes, 1, dilation), make_bn(planes)])
    if stride != 1:
        rep.append([True, make_sep(rng, planes, planes, 2, 1), make_bn(planes)])
    if stride == 1 and is_last:
        rep.append([True, make_sep(rng, planes, planes, 1, 1), make_bn(planes)])
    if not start_with_relu:
        rep[0][0] = False
    blk = dict(rep=rep)
    if planes != inplanes or stride != 1:
        blk["skip"] = make_convbn(rng, inplanes, planes, 1, stride=stride)
    else:
        blk["skip"] = None
    return blk


def make_backbone(rng, output_stride=16):
    if output_stride == 16:
        entry3, mid_dil, exit_dil = 2, 1, (1, 2)
    elif output_stride == 8:
        entry3, mid_dil, exit_dil = 1, 2, (2, 4)
    else:
        raise NotImplementedError
    p = {}
    p["conv1"] = make_conv1(rng)
    p["conv2"] = make_convbn(rng, 32, 64, 3)
    p["block1"] = make_block(rng, 64, 128, 2, stride=2, start_with_relu=False)
    p["block2"] = make_block(rng, 128, 256, 2, stride=2, start_with_relu=False, grow_first=True)
    p["block3"] = make_block(rng, 256, 728, 2, stride=entry3, start_with_relu=True,
                             grow_first=True, is_last=True)
    p["middle"] = [make_block(rng, 728, 728, 3, stride=1, dilation=mid_dil)
                   for _ in range(16)]                               # block4 .. block19
    p["block20"] = make_block(rng, 728, 1024, 2, stride=1, dilation=exit_dil[0],
                              start_with_relu=True, grow_first=False, is_last=True)
    p["conv3"] = dict(sep=make_sep(rng, 1024, 1536, 1, exit_dil[1]), bn=make_bn(1536))
    p["conv4"] = dict(sep=make_sep(rng, 1536, 1536, 1, exit_dil[1]), bn=make_bn(1536))
    p["conv5"] = dict(sep=make_sep(rng, 1536, 2048, 1, exit_dil[1]), bn=make_bn(2048))
    return p


def make_aspp(rng, output_stride=16):
    dil = [1, 6, 12, 18] if output_stride == 16 else [1, 12, 24, 36]
    inplanes = 2048
    p = {}
    p["aspp1"] = make_convbn(rng, inplanes, 256, 1, dil=dil[0])
    p["aspp2"] = make_convbn(rng, inplanes, 256, 3, dil=dil[1])
    p["aspp3"] = make_convbn(rng, inplanes, 256, 3, dil=dil[2])
    p["aspp4"] = make_convbn(rng, inplanes, 256, 3, dil=dil[3])
    # Global-average-pool branch: degenerate (1x1 spatial) matmul -> plain JAX glue.
    gw = rng.standard_normal((256, inplanes, 1, 1)).astype(np.float32) / np.sqrt(inplanes)
    p["gap"] = dict(w=jnp.asarray(gw.reshape(256, inplanes).T),
                    scale=jnp.full((256,), 1.0 / np.sqrt(1.0 + BN_EPS), jnp.float32),
                    bias=jnp.zeros((256,), jnp.float32))
    p["conv1"] = make_convbn(rng, 1280, 256, 1)
    return p


def make_decoder(rng, return_with_logits=True, low_level_inplanes=128):
    p = {}
    p["conv1"] = make_convbn(rng, low_level_inplanes, 48, 1)
    p["lc1"] = make_convbn(rng, 304, 256, 3)    # rows 304..383 zero => matches padded concat
    p["lc2"] = make_convbn(rng, 256, 256, 3)
    wf = rng.standard_normal((1, 256, 1, 1)).astype(np.float32) / np.sqrt(256)
    bf = rng.standard_normal((1,)).astype(np.float32) / np.sqrt(256)
    p["final"] = dict(w=jnp.asarray(wf.reshape(1, 256).T), b=jnp.asarray(bf))
    p["return_with_logits"] = return_with_logits
    return p


def make_deeplab(seed=0, return_with_logits=True, output_stride=16):
    rng = np.random.default_rng(seed)
    return dict(backbone=make_backbone(rng, output_stride),
                aspp=make_aspp(rng, output_stride),
                decoder=make_decoder(rng, return_with_logits))


# ---------------------------------------------------------------------------
# Forward pass
# ---------------------------------------------------------------------------

def run_block(x, blk, post_relu=False):
    # Skip branch consumes the block input BEFORE any ReLU (matches torch).
    sk = conv_bn(x, blk["skip"], relu=False) if blk["skip"] is not None else x
    reps = blk["rep"]
    n = len(reps)
    fused = reps[-1][1]["stride"] == 1        # residual/relu fused only for stride-1 blocks
    out = x
    absorbed = False                          # next rep's pre-ReLU already applied by producer
    for i, (pre_relu, sep, bn) in enumerate(reps):
        last = i == n - 1
        in_relu = pre_relu and not absorbed
        absorb_next = (not last) and reps[i + 1][0] and sep["stride"] == 1
        out_relu = absorb_next or (post_relu if (last and fused) else False)
        out = separable_conv(out, sep, bn, in_relu=in_relu, out_relu=out_relu,
                             residual=(sk if (last and fused) else None))
        absorbed = absorb_next
    if not fused:
        out = out + sk
        if post_relu:
            out = jnp.maximum(out, 0).astype(out.dtype)
    return out


def backbone_forward(p, x):
    x = conv1_forward(p["conv1"], x)
    x = conv_bn(x, p["conv2"], relu=True)
    x = run_block(x, p["block1"], post_relu=True)    # post-block ReLU (stride-2 block)
    low_level_feat = x
    x = run_block(x, p["block2"])
    x = run_block(x, p["block3"])
    for blk in p["middle"]:
        x = run_block(x, blk)
    x = run_block(x, p["block20"], post_relu=True)   # post-block ReLU fused into last rep
    for name in ("conv3", "conv4", "conv5"):
        c = p[name]
        x = separable_conv(x, c["sep"], c["bn"], in_relu=False, out_relu=True)
    return x, low_level_feat


def aspp_forward(p, x):
    H, W = x.shape[1], x.shape[2]
    feats = [conv_bn(x, p["aspp1"], relu=True),
             conv_bn(x, p["aspp2"], relu=True),
             conv_bn(x, p["aspp3"], relu=True),
             conv_bn(x, p["aspp4"], relu=True)]
    # AdaptiveAvgPool2d((1,1)) -> 1x1 conv -> BN -> ReLU: degenerate shapes, plain jnp glue.
    pooled = jnp.mean(x.astype(jnp.float32), axis=(1, 2), keepdims=True)
    g = jnp.einsum('nhwc,co->nhwo', pooled, p["gap"]["w"])
    g = jnp.maximum(g * p["gap"]["scale"] + p["gap"]["bias"], 0.0)
    g = interpolate_bilinear(g, H, W).astype(jnp.bfloat16)
    x = jnp.concatenate(feats + [g], axis=-1)        # 5 x 256 = 1280 channels
    x = conv_bn(x, p["conv1"], relu=True)
    # Dropout(0.5): eval-mode identity
    return x


def decoder_forward(p, x, low_level_feat):
    llf = conv_bn(low_level_feat, p["conv1"], relu=True)          # (N,H,W,128) real 48
    x = interpolate_bilinear(x, llf.shape[1], llf.shape[2]).astype(jnp.bfloat16)
    x = jnp.concatenate([x, llf], axis=-1)                        # 256 + 128(pad of 48) = 384
    x = conv_bn(x, p["lc1"], relu=True)
    # Dropout(0.5): eval-mode identity
    x = conv_bn(x, p["lc2"], relu=True)
    # Dropout(0.1): eval-mode identity
    # Final 1x1 conv, Cout=1 (degenerate lane width) -> plain jnp glue.
    y = jnp.einsum('nhwc,co->nhwo', x.astype(jnp.float32), p["final"]["w"]) + p["final"]["b"]
    if not p["return_with_logits"]:
        y = jax.nn.sigmoid(y)
    return y


def deeplab_forward(params, x_nchw):
    x = jnp.transpose(x_nchw, (0, 2, 3, 1)).astype(jnp.bfloat16)   # NCHW -> NHWC, bf16
    feat, low = backbone_forward(params["backbone"], x)
    y = aspp_forward(params["aspp"], feat)
    y = decoder_forward(params["decoder"], y, low)
    y = interpolate_bilinear(y, x.shape[1], x.shape[2])            # f32
    return jnp.transpose(y, (0, 3, 1, 2))                          # NHWC -> NCHW


# ---------------------------------------------------------------------------

if __name__ == "__main__":
    key = jax.random.PRNGKey(0)
    x = jax.random.normal(key, (2, 3, 32, 32), dtype=jnp.float32)  # PyTorch NCHW input

    params = make_deeplab(seed=0, return_with_logits=True, output_stride=16)
    out = deeplab_forward(params, x)
    out = jax.block_until_ready(out)

    assert out.shape == (2, 1, 32, 32), f"unexpected output shape {out.shape}"
    assert bool(jnp.all(jnp.isfinite(out))), "non-finite values in output"
    print("KERNEL_OK")
</pallas_src>

<mosaic_0001>
module attributes {stable_mosaic.version = 11 : i64} {
  func.func @_conv1x1_kernel(%arg0: i32, %arg1: i32, %arg2: i32, %arg3: memref<512x128xbf16, #tpu.memory_space<vmem>>, %arg4: memref<1x128x128xbf16, #tpu.memory_space<vmem>>, %arg5: memref<1x128xf32, #tpu.memory_space<vmem>>, %arg6: memref<1x128xf32, #tpu.memory_space<vmem>>, %arg7: memref<512x128xbf16, #tpu.memory_space<vmem>>, %arg8: memref<512x128xf32, #tpu.memory_space<vmem>>) attributes {dimension_semantics = [#tpu.dimension_semantics<parallel>, #tpu.dimension_semantics<parallel>, #tpu.dimension_semantics<arbitrary>], iteration_bounds = array<i64: 1, 1, 1>, scalar_prefetch = 0 : i64, scratch_operands = 1 : i64, tpu.core_type = #tpu.core_type<tc>, window_params = [{transform_indices = @transform_0, window_bounds = array<i64: 512, 128>}, {transform_indices = @transform_1, window_bounds = array<i64: 1, 128, 128>}, {transform_indices = @transform_2, window_bounds = array<i64: 1, 128>}, {transform_indices = @transform_3, window_bounds = array<i64: 1, 128>}, {transform_indices = @transform_4, window_bounds = array<i64: 512, 128>}]} {
    %c0_i32 = arith.constant 0 : i32
    %0 = arith.cmpi eq, %arg2, %c0_i32 : i32
    %1 = arith.extui %0 : i1 to i32
    %c0_i32_0 = arith.constant 0 : i32
    %2 = arith.cmpi ne, %1, %c0_i32_0 : i32
    scf.if %2 {
      %cst_11 = arith.constant 0.000000e+00 : f32
      %13 = vector.broadcast %cst_11 : f32 to vector<512x128xf32>
      %c0_12 = arith.constant 0 : index
      %c0_13 = arith.constant 0 : index
      %14 = vector.load %arg8[%c0_12, %c0_13] : memref<512x128xf32, #tpu.memory_space<vmem>>, vector<512x128xf32>
      tpu.vector_store %arg8[%c0_12, %c0_13], %13 {strides = array<i32>} : memref<512x128xf32, #tpu.memory_space<vmem>>, vector<512x128xf32>,
    } else {
    }
    %c0 = arith.constant 0 : index
    %c0_1 = arith.constant 0 : index
    %3 = vector.load %arg8[%c0, %c0_1] : memref<512x128xf32, #tpu.memory_space<vmem>>, vector<512x128xf32>
    %c0_2 = arith.constant 0 : index
    %c0_3 = arith.constant 0 : index
    %4 = vector.load %arg3[%c0_2, %c0_3] : memref<512x128xbf16, #tpu.memory_space<vmem>>, vector<512x128xbf16>
    %c0_4 = arith.constant 0 : index
    %c0_5 = arith.constant 0 : index
    %c0_6 = arith.constant 0 : index
    %5 = vector.load %arg4[%c0_4, %c0_5, %c0_6] : memref<1x128x128xbf16, #tpu.memory_space<vmem>>, vector<1x128x128xbf16>
    %6 = vector.shape_cast %5 : vector<1x128x128xbf16> to vector<128x128xbf16>
    %cst = arith.constant dense<0.000000e+00> : vector<512x128xf32>
    %7 = tpu.matmul %4, %6, %cst {dimension_numbers = #tpu.dot_dimension_numbers<[1], [0], [0], [1], [0, 0, 1, 1], [], []>} : vector<512x128xbf16>, vector<128x128xbf16>, vector<512x128xf32> -> vector<512x128xf32>
    %8 = arith.addf %3, %7 : vector<512x128xf32>
    %c0_7 = arith.constant 0 : index
    %c0_8 = arith.constant 0 : index
    %9 = vector.load %arg8[%c0_7, %c0_8] : memref<512x128xf32, #tpu.memory_space<vmem>>, vector<512x128xf32>
    tpu.vector_store %arg8[%c0_7, %c0_8], %8 {strides = array<i32>} : memref<512x128xf32, #tpu.memory_space<vmem>>, vector<512x128xf32>,
    %c0_i32_9 = arith.constant 0 : i32
    %10 = arith.cmpi eq, %arg2, %c0_i32_9 : i32
    %11 = arith.extui %10 : i1 to i32
    %c0_i32_10 = arith.constant 0 : i32
    %12 = arith.cmpi ne, %11, %c0_i32_10 : i32
    scf.if %12 {
      %c0_11 = arith.constant 0 : index
      %c0_12 = arith.constant 0 : index
      %13 = vector.load %arg8[%c0_11, %c0_12] : memref<512x128xf32, #tpu.memory_space<vmem>>, vector<512x128xf32>
      %c0_13 = arith.constant 0 : index
      %c0_14 = arith.constant 0 : index
      %14 = vector.load %arg5[%c0_13, %c0_14] : memref<1x128xf32, #tpu.memory_space<vmem>>, vector<1x128xf32>
      %15 = vector.broadcast %14 : vector<1x128xf32> to vector<512x128xf32>
      %16 = arith.mulf %13, %15 : vector<512x128xf32>
      %c0_15 = arith.constant 0 : index
      %c0_16 = arith.constant 0 : index
      %17 = vector.load %arg6[%c0_15, %c0_16] : memref<1x128xf32, #tpu.memory_space<vmem>>, vector<1x128xf32>
      %18 = vector.broadcast %17 : vector<1x128xf32> to vector<512x128xf32>
      %19 = arith.addf %16, %18 : vector<512x128xf32>
      %cst_17 = arith.constant 0.000000e+00 : f32
      %20 = vector.broadcast %cst_17 : f32 to vector<512x128xf32>
      %21 = arith.maximumf %19, %20 : vector<512x128xf32>
      %22 = arith.truncf %21 : vector<512x128xf32> to vector<512x128xbf16>
      %c0_18 = arith.constant 0 : index
      %c0_19 = arith.constant 0 : index
      %23 = vector.load %arg7[%c0_18, %c0_19] : memref<512x128xbf16, #tpu.memory_space<vmem>>, vector<512x128xbf16>
      tpu.vector_store %arg7[%c0_18, %c0_19], %22 {strides = array<i32>} : memref<512x128xbf16, #tpu.memory_space<vmem>>, vector<512x128xbf16>,
    } else {
    }
    return
  }
  func.func @transform_0(%arg0: i32, %arg1: i32, %arg2: i32) -> (i32, i32) {
    %c0_i32 = arith.constant 0 : i32
    return %arg0, %arg2 : i32, i32
  }
  func.func @transform_1(%arg0: i32, %arg1: i32, %arg2: i32) -> (i32, i32, i32) {
    %c0_i32 = arith.constant 0 : i32
    %c0_i32_0 = arith.constant 0 : i32
    return %c0_i32, %arg2, %arg1 : i32, i32, i32
  }
  func.func @transform_2(%arg0: i32, %arg1: i32, %arg2: i32) -> (i32, i32) {
    %c0_i32 = arith.constant 0 : i32
    %c0_i32_0 = arith.constant 0 : i32
    return %c0_i32, %arg1 : i32, i32
  }
  func.func @transform_3(%arg0: i32, %arg1: i32, %arg2: i32) -> (i32, i32) {
    %c0_i32 = arith.constant 0 : i32
    %c0_i32_0 = arith.constant 0 : i32
    return %c0_i32, %arg1 : i32, i32
  }
  func.func @transform_4(%arg0: i32, %arg1: i32, %arg2: i32) -> (i32, i32) {
    %c0_i32 = arith.constant 0 : i32
    return %arg0, %arg1 : i32, i32
  }
}

</mosaic_0001>

<llo_original>
// kernel: _conv_call.1
$region0: #{_conv_call.1}
  #allocation0 [shape = 'u32[]', space=smem, size = 0x4, offset = 0x4, fixed_abs, tag = 'smem constant byte address 0x4 - core index']
  #allocation1 [shape = 'u32[144,128]{1,0:T(1,128)}', space=vmem, size = 0x12000, scoped, tag = 'internal scratch']
  #allocation2 [shape = 'f32[512,128]{1,0:T(8,128)}', space=vmem, size = 0x40000, scoped, tag = 'scratch operand']
  %s0 = inlined_call_operand.hbm [shape: bf16[512,128], index: 0, kind: input, shape index: {}]
  %s1 = inlined_call_operand.hbm [shape: bf16[1,128,128], index: 1, kind: input, shape index: {}]
  %s2 = inlined_call_operand.vmem [shape: f32[1,128], index: 2, kind: input, shape index: {}]
  %s3 = inlined_call_operand.vmem [shape: f32[1,128], index: 3, kind: input, shape index: {}]
  %s4 = inlined_call_operand.hbm [shape: bf16[512,128], index: 4, kind: output, shape index: {}]
  %s5 = sld [smem:[#allocation0]]
  $region42: #{_conv_call.1} parent=0
    _
  %s7 = ssub.s32 1, %s5
  %s8 = scalar_select 0, %s7, %s5
  $region1: #{_conv_call.1} parent=0
    #allocation3 [shape = 'u8[131072]{0}', space=vmem, size = 0x20000, scoped, tag = 'input window, operand 0, single buffered']
    #allocation4 [shape = 's32[1]{0}', space=sflag, size = 0x4, scoped, tag = 'scoped memory for _conv_call.1']
    #allocation5 [shape = 's32[1]{0}', space=sflag, size = 0x4, scoped, tag = 'scoped memory for _conv_call.1']
    #allocation6 [shape = 'u8[32768]{0}', space=vmem, size = 0x8000, scoped, tag = 'input window, operand 1, single buffered']
    #allocation7 [shape = 's32[1]{0}', space=sflag, size = 0x4, scoped, tag = 'scoped memory for _conv_call.1']
    #allocation8 [shape = 'u8[131072]{0}', space=vmem, size = 0x20000, scoped, tag = 'output window, operand 0, single buffered']
    %9 = vsyncpa [#allocation4], 0
    %10 = vsyncpa [#allocation7], 0
    %11 = vsyncpa [#allocation5], 0
    // Predicated region
    $region2: #{_conv_call.1} parent=1 // pred_check
      _
    $region3: #{_conv_call.1} parent=1 // pred_check_branch
      %13 = sbr.rel (0) target = $region5
    $region4: #{_conv_call.1} parent=1 // pred_region
      %s15 = ssub.s32 4096, 4096
      %16 = vsyncadd [#allocation4], %s15
      %s17 = sshll.u32 [#allocation3], 4
      %s18 = int_to_ptr.vmem [resolvable:$true] %s17
      %23 = dma.hbm_to_vmem [thread:$0]  %s0, 4096, %s18, [#allocation4], 64, 64, 4
    $region5: #{_conv_call.1} parent=1 // pred_fallthru
      _
    // Predicated region
    $region6: #{_conv_call.1} parent=1 // pred_check
      _
    $region7: #{_conv_call.1} parent=1 // pred_check_branch
      %25 = sbr.rel (0) target = $region9
    $region8: #{_conv_call.1} parent=1 // pred_region
      %s27 = ssub.s32 1024, 1024
      %28 = vsyncadd [#allocation7], %s27
      %s29 = sshll.u32 [#allocation6], 4
      %s30 = int_to_ptr.vmem [resolvable:$true] %s29
      %35 = dma.hbm_to_vmem [thread:$0]  %s1, 1024, %s30, [#allocation7], 64, 64, 4
    $region9: #{_conv_call.1} parent=1 // pred_fallthru
      _
    // Predicated region
    $region10: #{_conv_call.1} parent=1 // pred_check
      _
    $region11: #{_conv_call.1} parent=1 // pred_check_branch
      %37 = sbr.rel (0) target = $region13
    $region12: #{_conv_call.1} parent=1 // pred_region
      _
    $region13: #{_conv_call.1} parent=1 // pred_fallthru
      _
    // Predicated region
    $region14: #{_conv_call.1} parent=1 // pred_check
      _
    $region15: #{_conv_call.1} parent=1 // pred_check_branch
      %39 = sbr.rel (0) target = $region17
    $region16: #{_conv_call.1} parent=1 // pred_region
      _
    $region17: #{_conv_call.1} parent=1 // pred_fallthru
      _
    // Predicated region
    $region18: #{_conv_call.1} parent=1 // pred_check
      _
    $region19: #{_conv_call.1} parent=1 // pred_check_branch
      %41 = sbr.rel (0) target = $region21
    $region20: #{_conv_call.1} parent=1 // pred_region
      %42 = dma.done [#allocation4], 4096
    $region21: #{_conv_call.1} parent=1 // pred_fallthru
      _
    // Predicated region
    $region22: #{_conv_call.1} parent=1 // pred_check
      _
    $region23: #{_conv_call.1} parent=1 // pred_check_branch
      %44 = sbr.rel (0) target = $region25
    $region24: #{_conv_call.1} parent=1 // pred_region
      %45 = dma.done [#allocation7], 1024
    $region25: #{_conv_call.1} parent=1 // pred_fallthru
      _
    %p47 = scmp.eq.s32.totalorder 0, 0
    // Predicated region
    $region26: #{_conv_call.1} parent=1 // pred_check
      %p48 = pneg %p47
    $region27: #{_conv_call.1} parent=1 // pred_check_branch
      %50 = sbr.rel (%p48) target = $region29
    $region28: #{_conv_call.1} parent=1 // pred_region
      %51 = vst [vmem:[#allocation2] sm:$0xff] 0.0
      %52 = vst [vmem:[#allocation2 + $0x8] sm:$0xff] 0.0
      %53 = vst [vmem:[#allocation2 + $0x10] sm:$0xff] 0.0
      %54 = vst [vmem:[#allocation2 + $0x18] sm:$0xff] 0.0
      %55 = vst [vmem:[#allocation2 + $0x20] sm:$0xff] 0.0
      %56 = vst [vmem:[#allocation2 + $0x28] sm:$0xff] 0.0
      %57 = vst [vmem:[#allocation2 + $0x30] sm:$0xff] 0.0
      %58 = vst [vmem:[#allocation2 + $0x38] sm:$0xff] 0.0
      %59 = vst [vmem:[#allocation2 + $0x40] sm:$0xff] 0.0
      %60 = vst [vmem:[#allocation2 + $0x48] sm:$0xff] 0.0
      %61 = vst [vmem:[#allocation2 + $0x50] sm:$0xff] 0.0
      %62 = vst [vmem:[#allocation2 + $0x58] sm:$0xff] 0.0
      %63 = vst [vmem:[#allocation2 + $0x60] sm:$0xff] 0.0
      %64 = vst [vmem:[#allocation2 + $0x68] sm:$0xff] 0.0
      %65 = vst [vmem:[#allocation2 + $0x70] sm:$0xff] 0.0
      %66 = vst [vmem:[#allocation2 + $0x78] sm:$0xff] 0.0
      %67 = vst [vmem:[#allocation2 + $0x80] sm:$0xff] 0.0
      %68 = vst [vmem:[#allocation2 + $0x88] sm:$0xff] 0.0
      %69 = vst [vmem:[#allocation2 + $0x90] sm:$0xff] 0.0
      %70 = vst [vmem:[#allocation2 + $0x98] sm:$0xff] 0.0
      %71 = vst [vmem:[#allocation2 + $0xa0] sm:$0xff] 0.0
      %72 = vst [vmem:[#allocation2 + $0xa8] sm:$0xff] 0.0
      %73 = vst [vmem:[#allocation2 + $0xb0] sm:$0xff] 0.0
      %74 = vst [vmem:[#allocation2 + $0xb8] sm:$0xff] 0.0
      %75 = vst [vmem:[#allocation2 + $0xc0] sm:$0xff] 0.0
      %76 = vst [vmem:[#allocation2 + $0xc8] sm:$0xff] 0.0
      %77 = vst [vmem:[#allocation2 + $0xd0] sm:$0xff] 0.0
      %78 = vst [vmem:[#allocation2 + $0xd8] sm:$0xff] 0.0
      %79 = vst [vmem:[#allocation2 + $0xe0] sm:$0xff] 0.0
      %80 = vst [vmem:[#allocation2 + $0xe8] sm:$0xff] 0.0
      %81 = vst [vmem:[#allocation2 + $0xf0] sm:$0xff] 0.0
      %82 = vst [vmem:[#allocation2 + $0xf8] sm:$0xff] 0.0
      %83 = vst [vmem:[#allocation2 + $0x100] sm:$0xff] 0.0
      %84 = vst [vmem:[#allocation2 + $0x108] sm:$0xff] 0.0
      %85 = vst [vmem:[#allocation2 + $0x110] sm:$0xff] 0.0
      %86 = vst [vmem:[#allocation2 + $0x118] sm:$0xff] 0.0
      %87 = vst [vmem:[#allocation2 + $0x120] sm:$0xff] 0.0
      %88 = vst [vmem:[#allocation2 + $0x128] sm:$0xff] 0.0
      %89 = vst [vmem:[#allocation2 + $0x130] sm:$0xff] 0.0
      %90 = vst [vmem:[#allocation2 + $0x138] sm:$0xff] 0.0
      %91 = vst [vmem:[#allocation2 + $0x140] sm:$0xff] 0.0
      %92 = vst [vmem:[#allocation2 + $0x148] sm:$0xff] 0.0
      %93 = vst [vmem:[#allocation2 + $0x150] sm:$0xff] 0.0
      %94 = vst [vmem:[#allocation2 + $0x158] sm:$0xff] 0.0
      %95 = vst [vmem:[#allocation2 + $0x160] sm:$0xff] 0.0
      %96 = vst [vmem:[#allocation2 + $0x168] sm:$0xff] 0.0
      %97 = vst [vmem:[#allocation2 + $0x170] sm:$0xff] 0.0
      %98 = vst [vmem:[#allocation2 + $0x178] sm:$0xff] 0.0
      %99 = vst [vmem:[#allocation2 + $0x180] sm:$0xff] 0.0
      %100 = vst [vmem:[#allocation2 + $0x188] sm:$0xff] 0.0
      %101 = vst [vmem:[#allocation2 + $0x190] sm:$0xff] 0.0
      %102 = vst [vmem:[#allocation2 + $0x198] sm:$0xff] 0.0
      %103 = vst [vmem:[#allocation2 + $0x1a0] sm:$0xff] 0.0
      %104 = vst [vmem:[#allocation2 + $0x1a8] sm:$0xff] 0.0
      %105 = vst [vmem:[#allocation2 + $0x1b0] sm:$0xff] 0.0
      %106 = vst [vmem:[#allocation2 + $0x1b8] sm:$0xff] 0.0
      %107 = vst [vmem:[#allocation2 + $0x1c0] sm:$0xff] 0.0
      %108 = vst [vmem:[#allocation2 + $0x1c8] sm:$0xff] 0.0
      %109 = vst [vmem:[#allocation2 + $0x1d0] sm:$0xff] 0.0
      %110 = vst [vmem:[#allocation2 + $0x1d8] sm:$0xff] 0.0
      %111 = vst [vmem:[#allocation2 + $0x1e0] sm:$0xff] 0.0
      %112 = vst [vmem:[#allocation2 + $0x1e8] sm:$0xff] 0.0
      %113 = vst [vmem:[#allocation2 + $0x1f0] sm:$0xff] 0.0
      %114 = vst [vmem:[#allocation2 + $0x1f8] sm:$0xff] 0.0
    $region29: #{_conv_call.1} parent=1 // pred_fallthru
      _
    %v115 = vld [vmem:[#allocation2] sm:$0xff]
    %v116 = vld [vmem:[#allocation2 + $0x8] sm:$0xff]
    %v117 = vld [vmem:[#allocation2 + $0x10] sm:$0xff]
    %v118 = vld [vmem:[#allocation2 + $0x18] sm:$0xff]
    %v119 = vld [vmem:[#allocation2 + $0x20] sm:$0xff]
    %v120 = vld [vmem:[#allocation2 + $0x28] sm:$0xff]
    %v121 = vld [vmem:[#allocation2 + $0x30] sm:$0xff]
    %v122 = vld [vmem:[#allocation2 + $0x38] sm:$0xff]
    %v123 = vld [vmem:[#allocation2 + $0x40] sm:$0xff]
    %v124 = vld [vmem:[#allocation2 + $0x48] sm:$0xff]
    %v125 = vld [vmem:[#allocation2 + $0x50] sm:$0xff]
    %v126 = vld [vmem:[#allocation2 + $0x58] sm:$0xff]
    %v127 = vld [vmem:[#allocation2 + $0x60] sm:$0xff]
    %v128 = vld [vmem:[#allocation2 + $0x68] sm:$0xff]
    %v129 = vld [vmem:[#allocation2 + $0x70] sm:$0xff]
    %v130 = vld [vmem:[#allocation2 + $0x78] sm:$0xff]
    %v131 = vld [vmem:[#allocation2 + $0x80] sm:$0xff]
    %v132 = vld [vmem:[#allocation2 + $0x88] sm:$0xff]
    %v133 = vld [vmem:[#allocation2 + $0x90] sm:$0xff]
    %v134 = vld [vmem:[#allocation2 + $0x98] sm:$0xff]
    %v135 = vld [vmem:[#allocation2 + $0xa0] sm:$0xff]
    %v136 = vld [vmem:[#allocation2 + $0xa8] sm:$0xff]
    %v137 = vld [vmem:[#allocation2 + $0xb0] sm:$0xff]
    %v138 = vld [vmem:[#allocation2 + $0xb8] sm:$0xff]
    %v139 = vld [vmem:[#allocation2 + $0xc0] sm:$0xff]
    %v140 = vld [vmem:[#allocation2 + $0xc8] sm:$0xff]
    %v141 = vld [vmem:[#allocation2 + $0xd0] sm:$0xff]
    %v142 = vld [vmem:[#allocation2 + $0xd8] sm:$0xff]
    %v143 = vld [vmem:[#allocation2 + $0xe0] sm:$0xff]
    %v144 = vld [vmem:[#allocation2 + $0xe8] sm:$0xff]
    %v145 = vld [vmem:[#allocation2 + $0xf0] sm:$0xff]
    %v146 = vld [vmem:[#allocation2 + $0xf8] sm:$0xff]
    %v147 = vld [vmem:[#allocation2 + $0x100] sm:$0xff]
    %v148 = vld [vmem:[#allocation2 + $0x108] sm:$0xff]
    %v149 = vld [vmem:[#allocation2 + $0x110] sm:$0xff]
    %v150 = vld [vmem:[#allocation2 + $0x118] sm:$0xff]
    %v151 = vld [vmem:[#allocation2 + $0x120] sm:$0xff]
    %v152 = vld [vmem:[#allocation2 + $0x128] sm:$0xff]
    %v153 = vld [vmem:[#allocation2 + $0x130] sm:$0xff]
    %v154 = vld [vmem:[#allocation2 + $0x138] sm:$0xff]
    %v155 = vld [vmem:[#allocation2 + $0x140] sm:$0xff]
    %v156 = vld [vmem:[#allocation2 + $0x148] sm:$0xff]
    %v157 = vld [vmem:[#allocation2 + $0x150] sm:$0xff]
    %v158 = vld [vmem:[#allocation2 + $0x158] sm:$0xff]
    %v159 = vld [vmem:[#allocation2 + $0x160] sm:$0xff]
    %v160 = vld [vmem:[#allocation2 + $0x168] sm:$0xff]
    %v161 = vld [vmem:[#allocation2 + $0x170] sm:$0xff]
    %v162 = vld [vmem:[#allocation2 + $0x178] sm:$0xff]
    %v163 = vld [vmem:[#allocation2 + $0x180] sm:$0xff]
    %v164 = vld [vmem:[#allocation2 + $0x188] sm:$0xff]
    %v165 = vld [vmem:[#allocation2 + $0x190] sm:$0xff]
    %v166 = vld [vmem:[#allocation2 + $0x198] sm:$0xff]
    %v167 = vld [vmem:[#allocation2 + $0x1a0] sm:$0xff]
    %v168 = vld [vmem:[#allocation2 + $0x1a8] sm:$0xff]
    %v169 = vld [vmem:[#allocation2 + $0x1b0] sm:$0xff]
    %v170 = vld [vmem:[#allocation2 + $0x1b8] sm:$0xff]
    %v171 = vld [vmem:[#allocation2 + $0x1c0] sm:$0xff]
    %v172 = vld [vmem:[#allocation2 + $0x1c8] sm:$0xff]
    %v173 = vld [vmem:[#allocation2 + $0x1d0] sm:$0xff]
    %v174 = vld [vmem:[#allocation2 + $0x1d8] sm:$0xff]
    %v175 = vld [vmem:[#allocation2 + $0x1e0] sm:$0xff]
    %v176 = vld [vmem:[#allocation2 + $0x1e8] sm:$0xff]
    %v177 = vld [vmem:[#allocation2 + $0x1f0] sm:$0xff]
    %v178 = vld [vmem:[#allocation2 + $0x1f8] sm:$0xff]
    %v179 = vld [vmem:[#allocation3] sm:$0xf]
    %v180 = vld [vmem:[#allocation3 + $0x4] sm:$0xf]
    %v181 = vld [vmem:[#allocation3 + $0x8] sm:$0xf]
    %v182 = vld [vmem:[#allocation3 + $0xc] sm:$0xf]
    %v183 = vld [vmem:[#allocation3 + $0x10] sm:$0xf]
    %v184 = vld [vmem:[#allocation3 + $0x14] sm:$0xf]
    %v185 = vld [vmem:[#allocation3 + $0x18] sm:$0xf]
    %v186 = vld [vmem:[#allocation3 + $0x1c] sm:$0xf]
    %v187 = vld [vmem:[#allocation3 + $0x20] sm:$0xf]
    %v188 = vld [vmem:[#allocation3 + $0x24] sm:$0xf]
    %v189 = vld [vmem:[#allocation3 + $0x28] sm:$0xf]
    %v190 = vld [vmem:[#allocation3 + $0x2c] sm:$0xf]
    %v191 = vld [vmem:[#allocation3 + $0x30] sm:$0xf]
    %v192 = vld [vmem:[#allocation3 + $0x34] sm:$0xf]
    %v193 = vld [vmem:[#allocation3 + $0x38] sm:$0xf]
    %v194 = vld [vmem:[#allocation3 + $0x3c] sm:$0xf]
    %v195 = vld [vmem:[#allocation3 + $0x40] sm:$0xf]
    %v196 = vld [vmem:[#allocation3 + $0x44] sm:$0xf]
    %v197 = vld [vmem:[#allocation3 + $0x48] sm:$0xf]
    %v198 = vld [vmem:[#allocation3 + $0x4c] sm:$0xf]
    %v199 = vld [vmem:[#allocation3 + $0x50] sm:$0xf]
    %v200 = vld [vmem:[#allocation3 + $0x54] sm:$0xf]
    %v201 = vld [vmem:[#allocation3 + $0x58] sm:$0xf]
    %v202 = vld [vmem:[#allocation3 + $0x5c] sm:$0xf]
    %v203 = vld [vmem:[#allocation3 + $0x60] sm:$0xf]
    %v204 = vld [vmem:[#allocation3 + $0x64] sm:$0xf]
    %v205 = vld [vmem:[#allocation3 + $0x68] sm:$0xf]
    %v206 = vld [vmem:[#allocation3 + $0x6c] sm:$0xf]
    %v207 = vld [vmem:[#allocation3 + $0x70] sm:$0xf]
    %v208 = vld [vmem:[#allocation3 + $0x74] sm:$0xf]
    %v209 = vld [vmem:[#allocation3 + $0x78] sm:$0xf]
    %v210 = vld [vmem:[#allocation3 + $0x7c] sm:$0xf]
    %v211 = vld [vmem:[#allocation3 + $0x80] sm:$0xf]
    %v212 = vld [vmem:[#allocation3 + $0x84] sm:$0xf]
    %v213 = vld [vmem:[#allocation3 + $0x88] sm:$0xf]
    %v214 = vld [vmem:[#allocation3 + $0x8c] sm:$0xf]
    %v215 = vld [vmem:[#allocation3 + $0x90] sm:$0xf]
    %v216 = vld [vmem:[#allocation3 + $0x94] sm:$0xf]
    %v217 = vld [vmem:[#allocation3 + $0x98] sm:$0xf]
    %v218 = vld [vmem:[#allocation3 + $0x9c] sm:$0xf]
    %v219 = vld [vmem:[#allocation3 + $0xa0] sm:$0xf]
    %v220 = vld [vmem:[#allocation3 + $0xa4] sm:$0xf]
    %v221 = vld [vmem:[#allocation3 + $0xa8] sm:$0xf]
    %v222 = vld [vmem:[#allocation3 + $0xac] sm:$0xf]
    %v223 = vld [vmem:[#allocation3 + $0xb0] sm:$0xf]
    %v224 = vld [vmem:[#allocation3 + $0xb4] sm:$0xf]
    %v225 = vld [vmem:[#allocation3 + $0xb8] sm:$0xf]
    %v226 = vld [vmem:[#allocation3 + $0xbc] sm:$0xf]
    %v227 = vld [vmem:[#allocation3 + $0xc0] sm:$0xf]
    %v228 = vld [vmem:[#allocation3 + $0xc4] sm:$0xf]
    %v229 = vld [vmem:[#allocation3 + $0xc8] sm:$0xf]
    %v230 = vld [vmem:[#allocation3 + $0xcc] sm:$0xf]
    %v231 = vld [vmem:[#allocation3 + $0xd0] sm:$0xf]
    %v232 = vld [vmem:[#allocation3 + $0xd4] sm:$0xf]
    %v233 = vld [vmem:[#allocation3 + $0xd8] sm:$0xf]
    %v234 = vld [vmem:[#allocation3 + $0xdc] sm:$0xf]
    %v235 = vld [vmem:[#allocation3 + $0xe0] sm:$0xf]
    %v236 = vld [vmem:[#allocation3 + $0xe4] sm:$0xf]
    %v237 = vld [vmem:[#allocation3 + $0xe8] sm:$0xf]
    %v238 = vld [vmem:[#allocation3 + $0xec] sm:$0xf]
    %v239 = vld [vmem:[#allocation3 + $0xf0] sm:$0xf]
    %v240 = vld [vmem:[#allocation3 + $0xf4] sm:$0xf]
    %v241 = vld [vmem:[#allocation3 + $0xf8] sm:$0xf]
    %v242 = vld [vmem:[#allocation3 + $0xfc] sm:$0xf]
    %v243 = vld [vmem:[#allocation6] sm:$0xf]
    %v244 = vld [vmem:[#allocation6 + $0x4] sm:$0xf]
    %v245 = vld [vmem:[#allocation6 + $0x8] sm:$0xf]
    %v246 = vld [vmem:[#allocation6 + $0xc] sm:$0xf]
    %v247 = vld [vmem:[#allocation6 + $0x10] sm:$0xf]
    %v248 = vld [vmem:[#allocation6 + $0x14] sm:$0xf]
    %v249 = vld [vmem:[#allocation6 + $0x18] sm:$0xf]
    %v250 = vld [vmem:[#allocation6 + $0x1c] sm:$0xf]
    %v251 = vld [vmem:[#allocation6 + $0x20] sm:$0xf]
    %v252 = vld [vmem:[#allocation6 + $0x24] sm:$0xf]
    %v253 = vld [vmem:[#allocation6 + $0x28] sm:$0xf]
    %v254 = vld [vmem:[#allocation6 + $0x2c] sm:$0xf]
    %v255 = vld [vmem:[#allocation6 + $0x30] sm:$0xf]
    %v256 = vld [vmem:[#allocation6 + $0x34] sm:$0xf]
    %v257 = vld [vmem:[#allocation6 + $0x38] sm:$0xf]
    %v258 = vld [vmem:[#allocation6 + $0x3c] sm:$0xf]
    %v323 = vunpack.c.l.b16 %v179
    %v324 = vunpack.c.l.b16 %v180
    %v325 = vunpack.c.l.b16 %v181
    %v326 = vunpack.c.l.b16 %v182
    %v327 = vunpack.c.l.b16 %v183
    %v328 = vunpack.c.l.b16 %v184
    %v329 = vunpack.c.l.b16 %v185
    %v330 = vunpack.c.l.b16 %v186
    %v331 = vunpack.c.l.b16 %v187
    %v332 = vunpack.c.l.b16 %v188
    %v333 = vunpack.c.l.b16 %v189
    %v334 = vunpack.c.l.b16 %v190
    %v335 = vunpack.c.l.b16 %v191
    %v336 = vunpack.c.l.b16 %v192
    %v337 = vunpack.c.l.b16 %v193
    %v338 = vunpack.c.l.b16 %v194
    %v339 = vunpack.c.l.b16 %v195
    %v340 = vunpack.c.l.b16 %v196
    %v341 = vunpack.c.l.b16 %v197
    %v342 = vunpack.c.l.b16 %v198
    %v343 = vunpack.c.l.b16 %v199
    %v344 = vunpack.c.l.b16 %v200
    %v345 = vunpack.c.l.b16 %v201
    %v346 = vunpack.c.l.b16 %v202
    %v347 = vunpack.c.l.b16 %v203
    %v348 = vunpack.c.l.b16 %v204
    %v349 = vunpack.c.l.b16 %v205
    %v350 = vunpack.c.l.b16 %v206
    %v351 = vunpack.c.l.b16 %v207
    %v352 = vunpack.c.l.b16 %v208
    %v353 = vunpack.c.l.b16 %v209
    %v354 = vunpack.c.l.b16 %v210
    %v355 = vunpack.c.l.b16 %v211
    %v356 = vunpack.c.l.b16 %v212
    %v357 = vunpack.c.l.b16 %v213
    %v358 = vunpack.c.l.b16 %v214
    %v359 = vunpack.c.l.b16 %v215
    %v360 = vunpack.c.l.b16 %v216
    %v361 = vunpack.c.l.b16 %v217
    %v362 = vunpack.c.l.b16 %v218
    %v363 = vunpack.c.l.b16 %v219
    %v364 = vunpack.c.l.b16 %v220
    %v365 = vunpack.c.l.b16 %v221
    %v366 = vunpack.c.l.b16 %v222
    %v367 = vunpack.c.l.b16 %v223
    %v368 = vunpack.c.l.b16 %v224
    %v369 = vunpack.c.l.b16 %v225
    %v370 = vunpack.c.l.b16 %v226
    %v371 = vunpack.c.l.b16 %v227
    %v372 = vunpack.c.l.b16 %v228
    %v373 = vunpack.c.l.b16 %v229
    %v374 = vunpack.c.l.b16 %v230
    %v375 = vunpack.c.l.b16 %v231
    %v376 = vunpack.c.l.b16 %v232
    %v377 = vunpack.c.l.b16 %v233
    %v378 = vunpack.c.l.b16 %v234
    %v379 = vunpack.c.l.b16 %v235
    %v380 = vunpack.c.l.b16 %v236
    %v381 = vunpack.c.l.b16 %v237
    %v382 = vunpack.c.l.b16 %v238
    %v383 = vunpack.c.l.b16 %v239
    %v384 = vunpack.c.l.b16 %v240
    %v385 = vunpack.c.l.b16 %v241
    %v386 = vunpack.c.l.b16 %v242
    %v387 = vpack.c.b16 %v324, %v323
    %v388 = vpack.c.b16 %v326, %v325
    %v389 = vpack.c.b16 %v328, %v327
    %v390 = vpack.c.b16 %v330, %v329
    %v391 = vpack.c.b16 %v332, %v331
    %v392 = vpack.c.b16 %v334, %v333
    %v393 = vpack.c.b16 %v336, %v335
    %v394 = vpack.c.b16 %v338, %v337
    %v395 = vpack.c.b16 %v340, %v339
    %v396 = vpack.c.b16 %v342, %v341
    %v397 = vpack.c.b16 %v344, %v343
    %v398 = vpack.c.b16 %v346, %v345
    %v399 = vpack.c.b16 %v348, %v347
    %v400 = vpack.c.b16 %v350, %v349
    %v401 = vpack.c.b16 %v352, %v351
    %v402 = vpack.c.b16 %v354, %v353
    %v403 = vpack.c.b16 %v356, %v355
    %v404 = vpack.c.b16 %v358, %v357
    %v405 = vpack.c.b16 %v360, %v359
    %v406 = vpack.c.b16 %v362, %v361
    %v407 = vpack.c.b16 %v364, %v363
    %v408 = vpack.c.b16 %v366, %v365
    %v409 = vpack.c.b16 %v368, %v367
    %v410 = vpack.c.b16 %v370, %v369
    %v411 = vpack.c.b16 %v372, %v371
    %v412 = vpack.c.b16 %v374, %v373
    %v413 = vpack.c.b16 %v376, %v375
    %v414 = vpack.c.b16 %v378, %v377
    %v415 = vpack.c.b16 %v380, %v379
    %v416 = vpack.c.b16 %v382, %v381
    %v417 = vpack.c.b16 %v384, %v383
    %v418 = vpack.c.b16 %v386, %v385
    %v467 = vunpack.c.l.b16 %v243
    %v468 = vunpack.c.l.b16 %v244
    %v469 = vunpack.c.l.b16 %v245
    %v470 = vunpack.c.l.b16 %v246
    %v471 = vunpack.c.l.b16 %v247
    %v472 = vunpack.c.l.b16 %v248
    %v473 = vunpack.c.l.b16 %v249
    %v474 = vunpack.c.l.b16 %v250
    %v475 = vunpack.c.l.b16 %v251
    %v476 = vunpack.c.l.b16 %v252
    %v477 = vunpack.c.l.b16 %v253
    %v478 = vunpack.c.l.b16 %v254
    %v479 = vunpack.c.l.b16 %v255
    %v480 = vunpack.c.l.b16 %v256
    %v481 = vunpack.c.l.b16 %v257
    %v482 = vunpack.c.l.b16 %v258
    %v483 = vpack.c.b16 %v468, %v467
    %v484 = vpack.c.b16 %v470, %v469
    %v485 = vpack.c.b16 %v472, %v471
    %v486 = vpack.c.b16 %v474, %v473
    %v487 = vpack.c.b16 %v476, %v475
    %v488 = vpack.c.b16 %v478, %v477
    %v489 = vpack.c.b16 %v480, %v479
    %v490 = vpack.c.b16 %v482, %v481
    %499 = vmatprep.subr.bf16.mxu0 0
    %500 = vmatpush1.bf16.msra.mxu0 %v483
    %501 = vmatprep.subr.bf16.mxu0 0
    %502 = vmatpush1.bf16.msra.mxu0 %v484
    %503 = vmatprep.subr.bf16.mxu0 0
    %504 = vmatpush1.bf16.msra.mxu0 %v485
    %505 = vmatprep.subr.bf16.mxu0 0
    %506 = vmatpush1.bf16.msra.mxu0 %v486
    %507 = vmatprep.subr.bf16.mxu0 0
    %508 = vmatpush1.bf16.msra.mxu0 %v487
    %509 = vmatprep.subr.bf16.mxu0 0
    %510 = vmatpush1.bf16.msra.mxu0 %v488
    %511 = vmatprep.subr.bf16.mxu0 0
    %512 = vmatpush1.bf16.msra.mxu0 %v489
    %513 = vmatprep.subr.bf16.mxu0 0
    %514 = vmatpush1.bf16.msra.mxu0 %v490
    %515 = vmatprep.subr.bf16.mxu0 0
    %516 = vmatpush1.bf16.msra.mxu0 0
    %517 = vmatprep.subr.bf16.mxu0 0
    %518 = vmatpush1.bf16.msra.mxu0 0
    %519 = vmatprep.subr.bf16.mxu0 0
    %520 = vmatpush1.bf16.msra.mxu0 0
    %521 = vmatprep.subr.bf16.mxu0 0
    %522 = vmatpush1.bf16.msra.mxu0 0
    %523 = vmatprep.subr.bf16.mxu0 0
    %524 = vmatpush1.bf16.msra.mxu0 0
    %525 = vmatprep.subr.bf16.mxu0 0
    %526 = vmatpush1.bf16.msra.mxu0 0
    %527 = vmatprep.subr.bf16.mxu0 0
    %528 = vmatpush1.bf16.msra.mxu0 0
    %529 = vmatprep.subr.bf16.mxu0 0
    %530 = vmatpush1.bf16.msra.mxu0 0
    %531 = vmatprep.mubr.bf16.mxu0 0
    %532 = vmatmul.mubr.bf16.gmra.mrb[0].mxu0 %v387
    %v533 = vpop.f32.mrb[0].mxu0
    %v534 = vadd.f32 0.0, %v533
    %v535 = vpop.f32.mrb[0].mxu0
    %v536 = vpop.f32.mrb[0].mxu0
    %v537 = vadd.f32 0.0, %v536
    %v538 = vpop.f32.mrb[0].mxu0
    %539 = vmatprep.mubr.bf16.mxu0 0
    %540 = vmatmul.mubr.bf16.gmra.mrb[0].mxu0 %v388
    %v541 = vpop.f32.mrb[0].mxu0
    %v542 = vadd.f32 0.0, %v541
    %v543 = vpop.f32.mrb[0].mxu0
    %v544 = vpop.f32.mrb[0].mxu0
    %v545 = vadd.f32 0.0, %v544
    %v546 = vpop.f32.mrb[0].mxu0
    %547 = vmatprep.mubr.bf16.mxu0 0
    %548 = vmatmul.mubr.bf16.gmra.mrb[0].mxu0 %v389
    %v549 = vpop.f32.mrb[0].mxu0
    %v550 = vadd.f32 0.0, %v549
    %v551 = vpop.f32.mrb[0].mxu0
    %v552 = vpop.f32.mrb[0].mxu0
    %v553 = vadd.f32 0.0, %v552
    %v554 = vpop.f32.mrb[0].mxu0
    %555 = vmatprep.mubr.bf16.mxu0 0
    %556 = vmatmul.mubr.bf16.gmra.mrb[0].mxu0 %v390
    %v557 = vpop.f32.mrb[0].mxu0
    %v558 = vadd.f32 0.0, %v557
    %v559 = vpop.f32.mrb[0].mxu0
    %v560 = vpop.f32.mrb[0].mxu0
    %v561 = vadd.f32 0.0, %v560
    %v562 = vpop.f32.mrb[0].mxu0
    %563 = vmatprep.mubr.bf16.mxu0 0
    %564 = vmatmul.mubr.bf16.gmra.mrb[0].mxu0 %v391
    %v565 = vpop.f32.mrb[0].mxu0
    %v566 = vadd.f32 0.0, %v565
    %v567 = vpop.f32.mrb[0].mxu0
    %v568 = vpop.f32.mrb[0].mxu0
    %v569 = vadd.f32 0.0, %v568
    %v570 = vpop.f32.mrb[0].mxu0
    %571 = vmatprep.mubr.bf16.mxu0 0
    %572 = vmatmul.mubr.bf16.gmra.mrb[0].mxu0 %v392
    %v573 = vpop.f32.mrb[0].mxu0
    %v574 = vadd.f32 0.0, %v573
    %v575 = vpop.f32.mrb[0].mxu0
    %v576 = vpop.f32.mrb[0].mxu0
    %v577 = vadd.f32 0.0, %v576
    %v578 = vpop.f32.mrb[0].mxu0
    %579 = vmatprep.mubr.bf16.mxu0 0
    %580 = vmatmul.mubr.bf16.gmra.mrb[0].mxu0 %v393
    %v581 = vpop.f32.mrb[0].mxu0
    %v582 = vadd.f32 0.0, %v581
    %v583 = vpop.f32.mrb[0].mxu0
    %v584 = vpop.f32.mrb[0].mxu0
    %v585 = vadd.f32 0.0, %v584
    %v586 = vpop.f32.mrb[0].mxu0
    %587 = vmatprep.mubr.bf16.mxu0 0
    %588 = vmatmul.mubr.bf16.gmra.mrb[0].mxu0 %v394
    %v589 = vpop.f32.mrb[0].mxu0
    %v590 = vadd.f32 0.0, %v589
    %v591 = vpop.f32.mrb[0].mxu0
    %v592 = vpop.f32.mrb[0].mxu0
    %v593 = vadd.f32 0.0, %v592
    %v594 = vpop.f32.mrb[0].mxu0
    %595 = vmatprep.mubr.bf16.mxu0 0
    %596 = vmatmul.mubr.bf16.gmra.mrb[0].mxu0 %v395
    %v597 = vpop.f32.mrb[0].mxu0
    %v598 = vadd.f32 0.0, %v597
    %v599 = vpop.f32.mrb[0].mxu0
    %v600 = vpop.f32.mrb[0].mxu0
    %v601 = vadd.f32 0.0, %v600
    %v602 = vpop.f32.mrb[0].mxu0
    %603 = vmatprep.mubr.bf16.mxu0 0
    %604 = vmatmul.mubr.bf16.gmra.mrb[0].mxu0 %v396
    %v605 = vpop.f32.mrb[0].mxu0
    %v606 = vadd.f32 0.0, %v605
    %v607 = vpop.f32.mrb[0].mxu0
    %v608 = vpop.f32.mrb[0].mxu0
    %v609 = vadd.f32 0.0, %v608
    %v610 = vpop.f32.mrb[0].mxu0
    %611 = vmatprep.mubr.bf16.mxu0 0
    %612 = vmatmul.mubr.bf16.gmra.mrb[0].mxu0 %v397
    %v613 = vpop.f32.mrb[0].mxu0
    %v614 = vadd.f32 0.0, %v613
    %v615 = vpop.f32.mrb[0].mxu0
    %v616 = vpop.f32.mrb[0].mxu0
    %v617 = vadd.f32 0.0, %v616
    %v618 = vpop.f32.mrb[0].mxu0
    %619 = vmatprep.mubr.bf16.mxu0 0
    %620 = vmatmul.mubr.bf16.gmra.mrb[0].mxu0 %v398
    %v621 = vpop.f32.mrb[0].mxu0
    %v622 = vadd.f32 0.0, %v621
    %v623 = vpop.f32.mrb[0].mxu0
    %v624 = vpop.f32.mrb[0].mxu0
    %v625 = vadd.f32 0.0, %v624
    %v626 = vpop.f32.mrb[0].mxu0
    %627 = vmatprep.mubr.bf16.mxu0 0
    %628 = vmatmul.mubr.bf16.gmra.mrb[0].mxu0 %v399
    %v629 = vpop.f32.mrb[0].mxu0
    %v630 = vadd.f32 0.0, %v629
    %v631 = vpop.f32.mrb[0].mxu0
    %v632 = vpop.f32.mrb[0].mxu0
    %v633 = vadd.f32 0.0, %v632
    %v634 = vpop.f32.mrb[0].mxu0
    %635 = vmatprep.mubr.bf16.mxu0 0
    %636 = vmatmul.mubr.bf16.gmra.mrb[0].mxu0 %v400
    %v637 = vpop.f32.mrb[0].mxu0
    %v638 = vadd.f32 0.0, %v637
    %v639 = vpop.f32.mrb[0].mxu0
    %v640 = vpop.f32.mrb[0].mxu0
    %v641 = vadd.f32 0.0, %v640
    %v642 = vpop.f32.mrb[0].mxu0
    %643 = vmatprep.mubr.bf16.mxu0 0
    %644 = vmatmul.mubr.bf16.gmra.mrb[0].mxu0 %v401
    %v645 = vpop.f32.mrb[0].mxu0
    %v646 = vadd.f32 0.0, %v645
    %v647 = vpop.f32.mrb[0].mxu0
    %v648 = vpop.f32.mrb[0].mxu0
    %v649 = vadd.f32 0.0, %v648
    %v650 = vpop.f32.mrb[0].mxu0
    %651 = vmatprep.mubr.bf16.mxu0 0
    %652 = vmatmul.mubr.bf16.gmra.mrb[0].mxu0 %v402
    %v653 = vpop.f32.mrb[0].mxu0
    %v654 = vadd.f32 0.0, %v653
    %v655 = vpop.f32.mrb[0].mxu0
    %v656 = vpop.f32.mrb[0].mxu0
    %v657 = vadd.f32 0.0, %v656
    %v658 = vpop.f32.mrb[0].mxu0
    %659 = vmatprep.mubr.bf16.mxu0 0
    %660 = vmatmul.mubr.bf16.gmra.mrb[0].mxu0 %v403
    %v661 = vpop.f32.mrb[0].mxu0
    %v662 = vadd.f32 0.0, %v661
    %v663 = vpop.f32.mrb[0].mxu0
    %v664 = vpop.f32.mrb[0].mxu0
    %v665 = vadd.f32 0.0, %v664
    %v666 = vpop.f32.mrb[0].mxu0
    %667 = vmatprep.mubr.bf16.mxu0 0
    %668 = vmatmul.mubr.bf16.gmra.mrb[0].mxu0 %v404
    %v669 = vpop.f32.mrb[0].mxu0
    %v670 = vadd.f32 0.0, %v669
    %v671 = vpop.f32.mrb[0].mxu0
    %v672 = vpop.f32.mrb[0].mxu0
    %v673 = vadd.f32 0.0, %v672
    %v674 = vpop.f32.mrb[0].mxu0
    %675 = vmatprep.mubr.bf16.mxu0 0
    %676 = vmatmul.mubr.bf16.gmra.mrb[0].mxu0 %v405
    %v677 = vpop.f32.mrb[0].mxu0
    %v678 = vadd.f32 0.0, %v677
    %v679 = vpop.f32.mrb[0].mxu0
    %v680 = vpop.f32.mrb[0].mxu0
    %v681 = vadd.f32 0.0, %v680
    %v682 = vpop.f32.mrb[0].mxu0
    %683 = vmatprep.mubr.bf16.mxu0 0
    %684 = vmatmul.mubr.bf16.gmra.mrb[0].mxu0 %v406
    %v685 = vpop.f32.mrb[0].mxu0
    %v686 = vadd.f32 0.0, %v685
    %v687 = vpop.f32.mrb[0].mxu0
    %v688 = vpop.f32.mrb[0].mxu0
    %v689 = vadd.f32 0.0, %v688
    %v690 = vpop.f32.mrb[0].mxu0
    %691 = vmatprep.mubr.bf16.mxu0 0
    %692 = vmatmul.mubr.bf16.gmra.mrb[0].mxu0 %v407
    %v693 = vpop.f32.mrb[0].mxu0
    %v694 = vadd.f32 0.0, %v693
    %v695 = vpop.f32.mrb[0].mxu0
    %v696 = vpop.f32.mrb[0].mxu0
    %v697 = vadd.f32 0.0, %v696
    %v698 = vpop.f32.mrb[0].mxu0
    %699 = vmatprep.mubr.bf16.mxu0 0
    %700 = vmatmul.mubr.bf16.gmra.mrb[0].mxu0 %v408
    %v701 = vpop.f32.mrb[0].mxu0
    %v702 = vadd.f32 0.0, %v701
    %v703 = vpop.f32.mrb[0].mxu0
    %v704 = vpop.f32.mrb[0].mxu0
    %v705 = vadd.f32 0.0, %v704
    %v706 = vpop.f32.mrb[0].mxu0
    %707 = vmatprep.mubr.bf16.mxu0 0
    %708 = vmatmul.mubr.bf16.gmra.mrb[0].mxu0 %v409
    %v709 = vpop.f32.mrb[0].mxu0
    %v710 = vadd.f32 0.0, %v709
    %v711 = vpop.f32.mrb[0].mxu0
    %v712 = vpop.f32.mrb[0].mxu0
    %v713 = vadd.f32 0.0, %v712
    %v714 = vpop.f32.mrb[0].mxu0
    %715 = vmatprep.mubr.bf16.mxu0 0
    %716 = vmatmul.mubr.bf16.gmra.mrb[0].mxu0 %v410
    %v717 = vpop.f32.mrb[0].mxu0
    %v718 = vadd.f32 0.0, %v717
    %v719 = vpop.f32.mrb[0].mxu0
    %v720 = vpop.f32.mrb[0].mxu0
    %v721 = vadd.f32 0.0, %v720
    %v722 = vpop.f32.mrb[0].mxu0
    %723 = vmatprep.mubr.bf16.mxu0 0
    %724 = vmatmul.mubr.bf16.gmra.mrb[0].mxu0 %v411
    %v725 = vpop.f32.mrb[0].mxu0
    %v726 = vadd.f32 0.0, %v725
    %v727 = vpop.f32.mrb[0].mxu0
    %v728 = vpop.f32.mrb[0].mxu0
    %v729 = vadd.f32 0.0, %v728
    %v730 = vpop.f32.mrb[0].mxu0
    %731 = vmatprep.mubr.bf16.mxu0 0
    %732 = vmatmul.mubr.bf16.gmra.mrb[0].mxu0 %v412
    %v733 = vpop.f32.mrb[0].mxu0
    %v734 = vadd.f32 0.0, %v733
    %v735 = vpop.f32.mrb[0].mxu0
    %v736 = vpop.f32.mrb[0].mxu0
    %v737 = vadd.f32 0.0, %v736
    %v738 = vpop.f32.mrb[0].mxu0
    %739 = vmatprep.mubr.bf16.mxu0 0
    %740 = vmatmul.mubr.bf16.gmra.mrb[0].mxu0 %v413
    %v741 = vpop.f32.mrb[0].mxu0
    %v742 = vadd.f32 0.0, %v741
    %v743 = vpop.f32.mrb[0].mxu0
    %v744 = vpop.f32.mrb[0].mxu0
    %v745 = vadd.f32 0.0, %v744
    %v746 = vpop.f32.mrb[0].mxu0
    %747 = vmatprep.mubr.bf16.mxu0 0
    %748 = vmatmul.mubr.bf16.gmra.mrb[0].mxu0 %v414
    %v749 = vpop.f32.mrb[0].mxu0
    %v750 = vadd.f32 0.0, %v749
    %v751 = vpop.f32.mrb[0].mxu0
    %v752 = vpop.f32.mrb[0].mxu0
    %v753 = vadd.f32 0.0, %v752
    %v754 = vpop.f32.mrb[0].mxu0
    %755 = vmatprep.mubr.bf16.mxu0 0
    %756 = vmatmul.mubr.bf16.gmra.mrb[0].mxu0 %v415
    %v757 = vpop.f32.mrb[0].mxu0
    %v758 = vadd.f32 0.0, %v757
    %v759 = vpop.f32.mrb[0].mxu0
    %v760 = vpop.f32.mrb[0].mxu0
    %v761 = vadd.f32 0.0, %v760
    %v762 = vpop.f32.mrb[0].mxu0
    %763 = vmatprep.mubr.bf16.mxu0 0
    %764 = vmatmul.mubr.bf16.gmra.mrb[0].mxu0 %v416
    %v765 = vpop.f32.mrb[0].mxu0
    %v766 = vadd.f32 0.0, %v765
    %v767 = vpop.f32.mrb[0].mxu0
    %v768 = vpop.f32.mrb[0].mxu0
    %v769 = vadd.f32 0.0, %v768
    %v770 = vpop.f32.mrb[0].mxu0
    %771 = vmatprep.mubr.bf16.mxu0 0
    %772 = vmatmul.mubr.bf16.gmra.mrb[0].mxu0 %v417
    %v773 = vpop.f32.mrb[0].mxu0
    %v774 = vadd.f32 0.0, %v773
    %v775 = vpop.f32.mrb[0].mxu0
    %v776 = vpop.f32.mrb[0].mxu0
    %v777 = vadd.f32 0.0, %v776
    %v778 = vpop.f32.mrb[0].mxu0
    %779 = vmatprep.mubr.bf16.mxu0 0
    %780 = vmatmul.mubr.bf16.gmra.mrb[0].mxu0 %v418
    %v781 = vpop.f32.mrb[0].mxu0
    %v782 = vadd.f32 0.0, %v781
    %v783 = vpop.f32.mrb[0].mxu0
    %v784 = vpop.f32.mrb[0].mxu0
    %v785 = vadd.f32 0.0, %v784
    %v786 = vpop.f32.mrb[0].mxu0
    %787 = vdwg.mxu0
    %v788 = vadd.f32 %v115, %v534
    %v789 = vadd.f32 %v116, %v537
    %v790 = vadd.f32 %v117, %v542
    %v791 = vadd.f32 %v118, %v545
    %v792 = vadd.f32 %v119, %v550
    %v793 = vadd.f32 %v120, %v553
    %v794 = vadd.f32 %v121, %v558
    %v795 = vadd.f32 %v122, %v561
    %v796 = vadd.f32 %v123, %v566
    %v797 = vadd.f32 %v124, %v569
    %v798 = vadd.f32 %v125, %v574
    %v799 = vadd.f32 %v126, %v577
    %v800 = vadd.f32 %v127, %v582
    %v801 = vadd.f32 %v128, %v585
    %v802 = vadd.f32 %v129, %v590
    %v803 = vadd.f32 %v130, %v593
    %v804 = vadd.f32 %v131, %v598
    %v805 = vadd.f32 %v132, %v601
    %v806 = vadd.f32 %v133, %v606
    %v807 = vadd.f32 %v134, %v609
    %v808 = vadd.f32 %v135, %v614
    %v809 = vadd.f32 %v136, %v617
    %v810 = vadd.f32 %v137, %v622
    %v811 = vadd.f32 %v138, %v625
    %v812 = vadd.f32 %v139, %v630
    %v813 = vadd.f32 %v140, %v633
    %v814 = vadd.f32 %v141, %v638
    %v815 = vadd.f32 %v142, %v641
    %v816 = vadd.f32 %v143, %v646
    %v817 = vadd.f32 %v144, %v649
    %v818 = vadd.f32 %v145, %v654
    %v819 = vadd.f32 %v146, %v657
    %v820 = vadd.f32 %v147, %v662
    %v821 = vadd.f32 %v148, %v665
    %v822 = vadd.f32 %v149, %v670
    %v823 = vadd.f32 %v150, %v673
    %v824 = vadd.f32 %v151, %v678
    %v825 = vadd.f32 %v152, %v681
    %v826 = vadd.f32 %v153, %v686
    %v827 = vadd.f32 %v154, %v689
    %v828 = vadd.f32 %v155, %v694
    %v829 = vadd.f32 %v156, %v697
    %v830 = vadd.f32 %v157, %v702
    %v831 = vadd.f32 %v158, %v705
    %v832 = vadd.f32 %v159, %v710
    %v833 = vadd.f32 %v160, %v713
    %v834 = vadd.f32 %v161, %v718
    %v835 = vadd.f32 %v162, %v721
    %v836 = vadd.f32 %v163, %v726
    %v837 = vadd.f32 %v164, %v729
    %v838 = vadd.f32 %v165, %v734
    %v839 = vadd.f32 %v166, %v737
    %v840 = vadd.f32 %v167, %v742
    %v841 = vadd.f32 %v168, %v745
    %v842 = vadd.f32 %v169, %v750
    %v843 = vadd.f32 %v170, %v753
    %v844 = vadd.f32 %v171, %v758
    %v845 = vadd.f32 %v172, %v761
    %v846 = vadd.f32 %v173, %v766
    %v847 = vadd.f32 %v174, %v769
    %v848 = vadd.f32 %v175, %v774
    %v849 = vadd.f32 %v176, %v777
    %v850 = vadd.f32 %v177, %v782
    %v851 = vadd.f32 %v178, %v785
    %852 = vst [vmem:[#allocation2] sm:$0xff] %v788
    %853 = vst [vmem:[#allocation2 + $0x8] sm:$0xff] %v789
    %854 = vst [vmem:[#allocation2 + $0x10] sm:$0xff] %v790
    %855 = vst [vmem:[#allocation2 + $0x18] sm:$0xff] %v791
    %856 = vst [vmem:[#allocation2 + $0x20] sm:$0xff] %v792
    %857 = vst [vmem:[#allocation2 + $0x28] sm:$0xff] %v793
    %858 = vst [vmem:[#allocation2 + $0x30] sm:$0xff] %v794
    %859 = vst [vmem:[#allocation2 + $0x38] sm:$0xff] %v795
    %860 = vst [vmem:[#allocation2 + $0x40] sm:$0xff] %v796
    %861 = vst [vmem:[#allocation2 + $0x48] sm:$0xff] %v797
    %862 = vst [vmem:[#allocation2 + $0x50] sm:$0xff] %v798
    %863 = vst [vmem:[#allocation2 + $0x58] sm:$0xff] %v799
    %864 = vst [vmem:[#allocation2 + $0x60] sm:$0xff] %v800
    %865 = vst [vmem:[#allocation2 + $0x68] sm:$0xff] %v801
    %866 = vst [vmem:[#allocation2 + $0x70] sm:$0xff] %v802
    %867 = vst [vmem:[#allocation2 + $0x78] sm:$0xff] %v803
    %868 = vst [vmem:[#allocation2 + $0x80] sm:$0xff] %v804
    %869 = vst [vmem:[#allocation2 + $0x88] sm:$0xff] %v805
    %870 = vst [vmem:[#allocation2 + $0x90] sm:$0xff] %v806
    %871 = vst [vmem:[#allocation2 + $0x98] sm:$0xff] %v807
    %872 = vst [vmem:[#allocation2 + $0xa0] sm:$0xff] %v808
    %873 = vst [vmem:[#allocation2 + $0xa8] sm:$0xff] %v809
    %874 = vst [vmem:[#allocation2 + $0xb0] sm:$0xff] %v810
    %875 = vst [vmem:[#allocation2 + $0xb8] sm:$0xff] %v811
    %876 = vst [vmem:[#allocation2 + $0xc0] sm:$0xff] %v812
    %877 = vst [vmem:[#allocation2 + $0xc8] sm:$0xff] %v813
    %878 = vst [vmem:[#allocation2 + $0xd0] sm:$0xff] %v814
    %879 = vst [vmem:[#allocation2 + $0xd8] sm:$0xff] %v815
    %880 = vst [vmem:[#allocation2 + $0xe0] sm:$0xff] %v816
    %881 = vst [vmem:[#allocation2 + $0xe8] sm:$0xff] %v817
    %882 = vst [vmem:[#allocation2 + $0xf0] sm:$0xff] %v818
    %883 = vst [vmem:[#allocation2 + $0xf8] sm:$0xff] %v819
    %884 = vst [vmem:[#allocation2 + $0x100] sm:$0xff] %v820
    %885 = vst [vmem:[#allocation2 + $0x108] sm:$0xff] %v821
    %886 = vst [vmem:[#allocation2 + $0x110] sm:$0xff] %v822
    %887 = vst [vmem:[#allocation2 + $0x118] sm:$0xff] %v823
    %888 = vst [vmem:[#allocation2 + $0x120] sm:$0xff] %v824
    %889 = vst [vmem:[#allocation2 + $0x128] sm:$0xff] %v825
    %890 = vst [vmem:[#allocation2 + $0x130] sm:$0xff] %v826
    %891 = vst [vmem:[#allocation2 + $0x138] sm:$0xff] %v827
    %892 = vst [vmem:[#allocation2 + $0x140] sm:$0xff] %v828
    %893 = vst [vmem:[#allocation2 + $0x148] sm:$0xff] %v829
    %894 = vst [vmem:[#allocation2 + $0x150] sm:$0xff] %v830
    %895 = vst [vmem:[#allocation2 + $0x158] sm:$0xff] %v831
    %896 = vst [vmem:[#allocation2 + $0x160] sm:$0xff] %v832
    %897 = vst [vmem:[#allocation2 + $0x168] sm:$0xff] %v833
    %898 = vst [vmem:[#allocation2 + $0x170] sm:$0xff] %v834
    %899 = vst [vmem:[#allocation2 + $0x178] sm:$0xff] %v835
    %900 = vst [vmem:[#allocation2 + $0x180] sm:$0xff] %v836
    %901 = vst [vmem:[#allocation2 + $0x188] sm:$0xff] %v837
    %902 = vst [vmem:[#allocation2 + $0x190] sm:$0xff] %v838
    %903 = vst [vmem:[#allocation2 + $0x198] sm:$0xff] %v839
    %904 = vst [vmem:[#allocation2 + $0x1a0] sm:$0xff] %v840
    %905 = vst [vmem:[#allocation2 + $0x1a8] sm:$0xff] %v841
    %906 = vst [vmem:[#allocation2 + $0x1b0] sm:$0xff] %v842
    %907 = vst [vmem:[#allocation2 + $0x1b8] sm:$0xff] %v843
    %908 = vst [vmem:[#allocation2 + $0x1c0] sm:$0xff] %v844
    %909 = vst [vmem:[#allocation2 + $0x1c8] sm:$0xff] %v845
    %910 = vst [vmem:[#allocation2 + $0x1d0] sm:$0xff] %v846
    %911 = vst [vmem:[#allocation2 + $0x1d8] sm:$0xff] %v847
    %912 = vst [vmem:[#allocation2 + $0x1e0] sm:$0xff] %v848
    %913 = vst [vmem:[#allocation2 + $0x1e8] sm:$0xff] %v849
    %914 = vst [vmem:[#allocation2 + $0x1f0] sm:$0xff] %v850
    %915 = vst [vmem:[#allocation2 + $0x1f8] sm:$0xff] %v851
    // Predicated region
    $region30: #{_conv_call.1} parent=1 // pred_check
      %p916 = pneg %p47
    $region31: #{_conv_call.1} parent=1 // pred_check_branch
      %918 = sbr.rel (%p916) target = $region33
    $region32: #{_conv_call.1} parent=1 // pred_region
      %v919 = vld [vmem:[#allocation2] sm:$0xff]
      %v920 = vld [vmem:[#allocation2 + $0x8] sm:$0xff]
      %v921 = vld [vmem:[#allocation2 + $0x10] sm:$0xff]
      %v922 = vld [vmem:[#allocation2 + $0x18] sm:$0xff]
      %v923 = vld [vmem:[#allocation2 + $0x20] sm:$0xff]
      %v924 = vld [vmem:[#allocation2 + $0x28] sm:$0xff]
      %v925 = vld [vmem:[#allocation2 + $0x30] sm:$0xff]
      %v926 = vld [vmem:[#allocation2 + $0x38] sm:$0xff]
      %v927 = vld [vmem:[#allocation2 + $0x40] sm:$0xff]
      %v928 = vld [vmem:[#allocation2 + $0x48] sm:$0xff]
      %v929 = vld [vmem:[#allocation2 + $0x50] sm:$0xff]
      %v930 = vld [vmem:[#allocation2 + $0x58] sm:$0xff]
      %v931 = vld [vmem:[#allocation2 + $0x60] sm:$0xff]
      %v932 = vld [vmem:[#allocation2 + $0x68] sm:$0xff]
      %v933 = vld [vmem:[#allocation2 + $0x70] sm:$0xff]
      %v934 = vld [vmem:[#allocation2 + $0x78] sm:$0xff]
      %v935 = vld [vmem:[#allocation2 + $0x80] sm:$0xff]
      %v936 = vld [vmem:[#allocation2 + $0x88] sm:$0xff]
      %v937 = vld [vmem:[#allocation2 + $0x90] sm:$0xff]
      %v938 = vld [vmem:[#allocation2 + $0x98] sm:$0xff]
      %v939 = vld [vmem:[#allocation2 + $0xa0] sm:$0xff]
      %v940 = vld [vmem:[#allocation2 + $0xa8] sm:$0xff]
      %v941 = vld [vmem:[#allocation2 + $0xb0] sm:$0xff]
      %v942 = vld [vmem:[#allocation2 + $0xb8] sm:$0xff]
      %v943 = vld [vmem:[#allocation2 + $0xc0] sm:$0xff]
      %v944 = vld [vmem:[#allocation2 + $0xc8] sm:$0xff]
      %v945 = vld [vmem:[#allocation2 + $0xd0] sm:$0xff]
      %v946 = vld [vmem:[#allocation2 + $0xd8] sm:$0xff]
      %v947 = vld [vmem:[#allocation2 + $0xe0] sm:$0xff]
      %v948 = vld [vmem:[#allocation2 + $0xe8] sm:$0xff]
      %v949 = vld [vmem:[#allocation2 + $0xf0] sm:$0xff]
      %v950 = vld [vmem:[#allocation2 + $0xf8] sm:$0xff]
      %v951 = vld [vmem:[#allocation2 + $0x100] sm:$0xff]
      %v952 = vld [vmem:[#allocation2 + $0x108] sm:$0xff]
      %v953 = vld [vmem:[#allocation2 + $0x110] sm:$0xff]
      %v954 = vld [vmem:[#allocation2 + $0x118] sm:$0xff]
      %v955 = vld [vmem:[#allocation2 + $0x120] sm:$0xff]
      %v956 = vld [vmem:[#allocation2 + $0x128] sm:$0xff]
      %v957 = vld [vmem:[#allocation2 + $0x130] sm:$0xff]
      %v958 = vld [vmem:[#allocation2 + $0x138] sm:$0xff]
      %v959 = vld [vmem:[#allocation2 + $0x140] sm:$0xff]
      %v960 = vld [vmem:[#allocation2 + $0x148] sm:$0xff]
      %v961 = vld [vmem:[#allocation2 + $0x150] sm:$0xff]
      %v962 = vld [vmem:[#allocation2 + $0x158] sm:$0xff]
      %v963 = vld [vmem:[#allocation2 + $0x160] sm:$0xff]
      %v964 = vld [vmem:[#allocation2 + $0x168] sm:$0xff]
      %v965 = vld [vmem:[#allocation2 + $0x170] sm:$0xff]
      %v966 = vld [vmem:[#allocation2 + $0x178] sm:$0xff]
      %v967 = vld [vmem:[#allocation2 + $0x180] sm:$0xff]
      %v968 = vld [vmem:[#allocation2 + $0x188] sm:$0xff]
      %v969 = vld [vmem:[#allocation2 + $0x190] sm:$0xff]
      %v970 = vld [vmem:[#allocation2 + $0x198] sm:$0xff]
      %v971 = vld [vmem:[#allocation2 + $0x1a0] sm:$0xff]
      %v972 = vld [vmem:[#allocation2 + $0x1a8] sm:$0xff]
      %v973 = vld [vmem:[#allocation2 + $0x1b0] sm:$0xff]
      %v974 = vld [vmem:[#allocation2 + $0x1b8] sm:$0xff]
      %v975 = vld [vmem:[#allocation2 + $0x1c0] sm:$0xff]
      %v976 = vld [vmem:[#allocation2 + $0x1c8] sm:$0xff]
      %v977 = vld [vmem:[#allocation2 + $0x1d0] sm:$0xff]
      %v978 = vld [vmem:[#allocation2 + $0x1d8] sm:$0xff]
      %v979 = vld [vmem:[#allocation2 + $0x1e0] sm:$0xff]
      %v980 = vld [vmem:[#allocation2 + $0x1e8] sm:$0xff]
      %v981 = vld [vmem:[#allocation2 + $0x1f0] sm:$0xff]
      %v982 = vld [vmem:[#allocation2 + $0x1f8] sm:$0xff]
      %v983 = vld [vmem:[%s2] sm:$0x1]
      %v985 = vlaneseq
      %v986 = vshrl.u32 %v985, 7
      %v987 = vsub.s32 0, %v986
      %v988 = vrot.slane %v983, %v987
      %v990 = vmul.f32 %v919, %v988
      %v991 = vmul.f32 %v920, %v988
      %v992 = vmul.f32 %v921, %v988
      %v993 = vmul.f32 %v922, %v988
      %v994 = vmul.f32 %v923, %v988
      %v995 = vmul.f32 %v924, %v988
      %v996 = vmul.f32 %v925, %v988
      %v997 = vmul.f32 %v926, %v988
      %v998 = vmul.f32 %v927, %v988
      %v999 = vmul.f32 %v928, %v988
      %v1000 = vmul.f32 %v929, %v988
      %v1001 = vmul.f32 %v930, %v988
      %v1002 = vmul.f32 %v931, %v988
      %v1003 = vmul.f32 %v932, %v988
      %v1004 = vmul.f32 %v933, %v988
      %v1005 = vmul.f32 %v934, %v988
      %v1006 = vmul.f32 %v935, %v988
      %v1007 = vmul.f32 %v936, %v988
      %v1008 = vmul.f32 %v937, %v988
      %v1009 = vmul.f32 %v938, %v988
      %v1010 = vmul.f32 %v939, %v988
      %v1011 = vmul.f32 %v940, %v988
      %v1012 = vmul.f32 %v941, %v988
      %v1013 = vmul.f32 %v942, %v988
      %v1014 = vmul.f32 %v943, %v988
      %v1015 = vmul.f32 %v944, %v988
      %v1016 = vmul.f32 %v945, %v988
      %v1017 = vmul.f32 %v946, %v988
      %v1018 = vmul.f32 %v947, %v988
      %v1019 = vmul.f32 %v948, %v988
      %v1020 = vmul.f32 %v949, %v988
      %v1021 = vmul.f32 %v950, %v988
      %v1022 = vmul.f32 %v951, %v988
      %v1023 = vmul.f32 %v952, %v988
      %v1024 = vmul.f32 %v953, %v988
      %v1025 = vmul.f32 %v954, %v988
      %v1026 = vmul.f32 %v955, %v988
      %v1027 = vmul.f32 %v956, %v988
      %v1028 = vmul.f32 %v957, %v988
      %v1029 = vmul.f32 %v958, %v988
      %v1030 = vmul.f32 %v959, %v988
      %v1031 = vmul.f32 %v960, %v988
      %v1032 = vmul.f32 %v961, %v988
      %v1033 = vmul.f32 %v962, %v988
      %v1034 = vmul.f32 %v963, %v988
      %v1035 = vmul.f32 %v964, %v988
      %v1036 = vmul.f32 %v965, %v988
      %v1037 = vmul.f32 %v966, %v988
      %v1038 = vmul.f32 %v967, %v988
      %v1039 = vmul.f32 %v968, %v988
      %v1040 = vmul.f32 %v969, %v988
      %v1041 = vmul.f32 %v970, %v988
      %v1042 = vmul.f32 %v971, %v988
      %v1043 = vmul.f32 %v972, %v988
      %v1044 = vmul.f32 %v973, %v988
      %v1045 = vmul.f32 %v974, %v988
      %v1046 = vmul.f32 %v975, %v988
      %v1047 = vmul.f32 %v976, %v988
      %v1048 = vmul.f32 %v977, %v988
      %v1049 = vmul.f32 %v978, %v988
      %v1050 = vmul.f32 %v979, %v988
      %v1051 = vmul.f32 %v980, %v988
      %v1052 = vmul.f32 %v981, %v988
      %v1053 = vmul.f32 %v982, %v988
      %v1054 = vld [vmem:[%s3] sm:$0x1]
      %v1056 = vlaneseq
      %v1057 = vshrl.u32 %v1056, 7
      %v1058 = vsub.s32 0, %v1057
      %v1059 = vrot.slane %v1054, %v1058
      %v1061 = vadd.f32 %v990, %v1059
      %v1062 = vadd.f32 %v991, %v1059
      %v1063 = vadd.f32 %v992, %v1059
      %v1064 = vadd.f32 %v993, %v1059
      %v1065 = vadd.f32 %v994, %v1059
      %v1066 = vadd.f32 %v995, %v1059
      %v1067 = vadd.f32 %v996, %v1059
      %v1068 = vadd.f32 %v997, %v1059
      %v1069 = vadd.f32 %v998, %v1059
      %v1070 = vadd.f32 %v999, %v1059
      %v1071 = vadd.f32 %v1000, %v1059
      %v1072 = vadd.f32 %v1001, %v1059
      %v1073 = vadd.f32 %v1002, %v1059
      %v1074 = vadd.f32 %v1003, %v1059
      %v1075 = vadd.f32 %v1004, %v1059
      %v1076 = vadd.f32 %v1005, %v1059
      %v1077 = vadd.f32 %v1006, %v1059
      %v1078 = vadd.f32 %v1007, %v1059
      %v1079 = vadd.f32 %v1008, %v1059
      %v1080 = vadd.f32 %v1009, %v1059
      %v1081 = vadd.f32 %v1010, %v1059
      %v1082 = vadd.f32 %v1011, %v1059
      %v1083 = vadd.f32 %v1012, %v1059
      %v1084 = vadd.f32 %v1013, %v1059
      %v1085 = vadd.f32 %v1014, %v1059
      %v1086 = vadd.f32 %v1015, %v1059
      %v1087 = vadd.f32 %v1016, %v1059
      %v1088 = vadd.f32 %v1017, %v1059
      %v1089 = vadd.f32 %v1018, %v1059
      %v1090 = vadd.f32 %v1019, %v1059
      %v1091 = vadd.f32 %v1020, %v1059
      %v1092 = vadd.f32 %v1021, %v1059
      %v1093 = vadd.f32 %v1022, %v1059
      %v1094 = vadd.f32 %v1023, %v1059
      %v1095 = vadd.f32 %v1024, %v1059
      %v1096 = vadd.f32 %v1025, %v1059
      %v1097 = vadd.f32 %v1026, %v1059
      %v1098 = vadd.f32 %v1027, %v1059
      %v1099 = vadd.f32 %v1028, %v1059
      %v1100 = vadd.f32 %v1029, %v1059
      %v1101 = vadd.f32 %v1030, %v1059
      %v1102 = vadd.f32 %v1031, %v1059
      %v1103 = vadd.f32 %v1032, %v1059
      %v1104 = vadd.f32 %v1033, %v1059
      %v1105 = vadd.f32 %v1034, %v1059
      %v1106 = vadd.f32 %v1035, %v1059
      %v1107 = vadd.f32 %v1036, %v1059
      %v1108 = vadd.f32 %v1037, %v1059
      %v1109 = vadd.f32 %v1038, %v1059
      %v1110 = vadd.f32 %v1039, %v1059
      %v1111 = vadd.f32 %v1040, %v1059
      %v1112 = vadd.f32 %v1041, %v1059
      %v1113 = vadd.f32 %v1042, %v1059
      %v1114 = vadd.f32 %v1043, %v1059
      %v1115 = vadd.f32 %v1044, %v1059
      %v1116 = vadd.f32 %v1045, %v1059
      %v1117 = vadd.f32 %v1046, %v1059
      %v1118 = vadd.f32 %v1047, %v1059
      %v1119 = vadd.f32 %v1048, %v1059
      %v1120 = vadd.f32 %v1049, %v1059
      %v1121 = vadd.f32 %v1050, %v1059
      %v1122 = vadd.f32 %v1051, %v1059
      %v1123 = vadd.f32 %v1052, %v1059
      %v1124 = vadd.f32 %v1053, %v1059
      %v1125 = vmax.f32 %v1061, 0.0
      %v1126 = vmax.f32 %v1062, 0.0
      %v1127 = vmax.f32 %v1063, 0.0
      %v1128 = vmax.f32 %v1064, 0.0
      %v1129 = vmax.f32 %v1065, 0.0
      %v1130 = vmax.f32 %v1066, 0.0
      %v1131 = vmax.f32 %v1067, 0.0
      %v1132 = vmax.f32 %v1068, 0.0
      %v1133 = vmax.f32 %v1069, 0.0
      %v1134 = vmax.f32 %v1070, 0.0
      %v1135 = vmax.f32 %v1071, 0.0
      %v1136 = vmax.f32 %v1072, 0.0
      %v1137 = vmax.f32 %v1073, 0.0
      %v1138 = vmax.f32 %v1074, 0.0
      %v1139 = vmax.f32 %v1075, 0.0
      %v1140 = vmax.f32 %v1076, 0.0
      %v1141 = vmax.f32 %v1077, 0.0
      %v1142 = vmax.f32 %v1078, 0.0
      %v1143 = vmax.f32 %v1079, 0.0
      %v1144 = vmax.f32 %v1080, 0.0
      %v1145 = vmax.f32 %v1081, 0.0
      %v1146 = vmax.f32 %v1082, 0.0
      %v1147 = vmax.f32 %v1083, 0.0
      %v1148 = vmax.f32 %v1084, 0.0
      %v1149 = vmax.f32 %v1085, 0.0
      %v1150 = vmax.f32 %v1086, 0.0
      %v1151 = vmax.f32 %v1087, 0.0
      %v1152 = vmax.f32 %v1088, 0.0
      %v1153 = vmax.f32 %v1089, 0.0
      %v1154 = vmax.f32 %v1090, 0.0
      %v1155 = vmax.f32 %v1091, 0.0
      %v1156 = vmax.f32 %v1092, 0.0
      %v1157 = vmax.f32 %v1093, 0.0
      %v1158 = vmax.f32 %v1094, 0.0
      %v1159 = vmax.f32 %v1095, 0.0
      %v1160 = vmax.f32 %v1096, 0.0
      %v1161 = vmax.f32 %v1097, 0.0
      %v1162 = vmax.f32 %v1098, 0.0
      %v1163 = vmax.f32 %v1099, 0.0
      %v1164 = vmax.f32 %v1100, 0.0
      %v1165 = vmax.f32 %v1101, 0.0
      %v1166 = vmax.f32 %v1102, 0.0
      %v1167 = vmax.f32 %v1103, 0.0
      %v1168 = vmax.f32 %v1104, 0.0
      %v1169 = vmax.f32 %v1105, 0.0
      %v1170 = vmax.f32 %v1106, 0.0
      %v1171 = vmax.f32 %v1107, 0.0
      %v1172 = vmax.f32 %v1108, 0.0
      %v1173 = vmax.f32 %v1109, 0.0
      %v1174 = vmax.f32 %v1110, 0.0
      %v1175 = vmax.f32 %v1111, 0.0
      %v1176 = vmax.f32 %v1112, 0.0
      %v1177 = vmax.f32 %v1113, 0.0
      %v1178 = vmax.f32 %v1114, 0.0
      %v1179 = vmax.f32 %v1115, 0.0
      %v1180 = vmax.f32 %v1116, 0.0
      %v1181 = vmax.f32 %v1117, 0.0
      %v1182 = vmax.f32 %v1118, 0.0
      %v1183 = vmax.f32 %v1119, 0.0
      %v1184 = vmax.f32 %v1120, 0.0
      %v1185 = vmax.f32 %v1121, 0.0
      %v1186 = vmax.f32 %v1122, 0.0
      %v1187 = vmax.f32 %v1123, 0.0
      %v1188 = vmax.f32 %v1124, 0.0
      %v1189 = vpack.c.bf16 %v1126, %v1125
      %v1190 = vpack.c.bf16 %v1128, %v1127
      %v1191 = vpack.c.bf16 %v1130, %v1129
      %v1192 = vpack.c.bf16 %v1132, %v1131
      %v1193 = vpack.c.bf16 %v1134, %v1133
      %v1194 = vpack.c.bf16 %v1136, %v1135
      %v1195 = vpack.c.bf16 %v1138, %v1137
      %v1196 = vpack.c.bf16 %v1140, %v1139
      %v1197 = vpack.c.bf16 %v1142, %v1141
      %v1198 = vpack.c.bf16 %v1144, %v1143
      %v1199 = vpack.c.bf16 %v1146, %v1145
      %v1200 = vpack.c.bf16 %v1148, %v1147
      %v1201 = vpack.c.bf16 %v1150, %v1149
      %v1202 = vpack.c.bf16 %v1152, %v1151
      %v1203 = vpack.c.bf16 %v1154, %v1153
      %v1204 = vpack.c.bf16 %v1156, %v1155
      %v1205 = vpack.c.bf16 %v1158, %v1157
      %v1206 = vpack.c.bf16 %v1160, %v1159
      %v1207 = vpack.c.bf16 %v1162, %v1161
      %v1208 = vpack.c.bf16 %v1164, %v1163
      %v1209 = vpack.c.bf16 %v1166, %v1165
      %v1210 = vpack.c.bf16 %v1168, %v1167
      %v1211 = vpack.c.bf16 %v1170, %v1169
      %v1212 = vpack.c.bf16 %v1172, %v1171
      %v1213 = vpack.c.bf16 %v1174, %v1173
      %v1214 = vpack.c.bf16 %v1176, %v1175
      %v1215 = vpack.c.bf16 %v1178, %v1177
      %v1216 = vpack.c.bf16 %v1180, %v1179
      %v1217 = vpack.c.bf16 %v1182, %v1181
      %v1218 = vpack.c.bf16 %v1184, %v1183
      %v1219 = vpack.c.bf16 %v1186, %v1185
      %v1220 = vpack.c.bf16 %v1188, %v1187
      %v1253 = vunpack.c.l.b16 %v1189
      %v1254 = vunpack.c.h.b16 %v1189
      %v1255 = vunpack.c.l.b16 %v1190
      %v1256 = vunpack.c.h.b16 %v1190
      %v1257 = vunpack.c.l.b16 %v1191
      %v1258 = vunpack.c.h.b16 %v1191
      %v1259 = vunpack.c.l.b16 %v1192
      %v1260 = vunpack.c.h.b16 %v1192
      %v1261 = vunpack.c.l.b16 %v1193
      %v1262 = vunpack.c.h.b16 %v1193
      %v1263 = vunpack.c.l.b16 %v1194
      %v1264 = vunpack.c.h.b16 %v1194
      %v1265 = vunpack.c.l.b16 %v1195
      %v1266 = vunpack.c.h.b16 %v1195
      %v1267 = vunpack.c.l.b16 %v1196
      %v1268 = vunpack.c.h.b16 %v1196
      %v1269 = vunpack.c.l.b16 %v1197
      %v1270 = vunpack.c.h.b16 %v1197
      %v1271 = vunpack.c.l.b16 %v1198
      %v1272 = vunpack.c.h.b16 %v1198
      %v1273 = vunpack.c.l.b16 %v1199
      %v1274 = vunpack.c.h.b16 %v1199
      %v1275 = vunpack.c.l.b16 %v1200
      %v1276 = vunpack.c.h.b16 %v1200
      %v1277 = vunpack.c.l.b16 %v1201
      %v1278 = vunpack.c.h.b16 %v1201
      %v1279 = vunpack.c.l.b16 %v1202
      %v1280 = vunpack.c.h.b16 %v1202
      %v1281 = vunpack.c.l.b16 %v1203
      %v1282 = vunpack.c.h.b16 %v1203
      %v1283 = vunpack.c.l.b16 %v1204
      %v1284 = vunpack.c.h.b16 %v1204
      %v1285 = vunpack.c.l.b16 %v1205
      %v1286 = vunpack.c.h.b16 %v1205
      %v1287 = vunpack.c.l.b16 %v1206
      %v1288 = vunpack.c.h.b16 %v1206
      %v1289 = vunpack.c.l.b16 %v1207
      %v1290 = vunpack.c.h.b16 %v1207
      %v1291 = vunpack.c.l.b16 %v1208
      %v1292 = vunpack.c.h.b16 %v1208
      %v1293 = vunpack.c.l.b16 %v1209
      %v1294 = vunpack.c.h.b16 %v1209
      %v1295 = vunpack.c.l.b16 %v1210
      %v1296 = vunpack.c.h.b16 %v1210
      %v1297 = vunpack.c.l.b16 %v1211
      %v1298 = vunpack.c.h.b16 %v1211
      %v1299 = vunpack.c.l.b16 %v1212
      %v1300 = vunpack.c.h.b16 %v1212
      %v1301 = vunpack.c.l.b16 %v1213
      %v1302 = vunpack.c.h.b16 %v1213
      %v1303 = vunpack.c.l.b16 %v1214
      %v1304 = vunpack.c.h.b16 %v1214
      %v1305 = vunpack.c.l.b16 %v1215
      %v1306 = vunpack.c.h.b16 %v1215
      %v1307 = vunpack.c.l.b16 %v1216
      %v1308 = vunpack.c.h.b16 %v1216
      %v1309 = vunpack.c.l.b16 %v1217
      %v1310 = vunpack.c.h.b16 %v1217
      %v1311 = vunpack.c.l.b16 %v1218
      %v1312 = vunpack.c.h.b16 %v1218
      %v1313 = vunpack.c.l.b16 %v1219
      %v1314 = vunpack.c.h.b16 %v1219
      %v1315 = vunpack.c.l.b16 %v1220
      %v1316 = vunpack.c.h.b16 %v1220
      %v1317 = vpack.c.b16 %v1253, %v1253
      %v1318 = vpack.c.b16 %v1254, %v1254
      %v1319 = vpack.c.b16 %v1255, %v1255
      %v1320 = vpack.c.b16 %v1256, %v1256
      %v1321 = vpack.c.b16 %v1257, %v1257
      %v1322 = vpack.c.b16 %v1258, %v1258
      %v1323 = vpack.c.b16 %v1259, %v1259
      %v1324 = vpack.c.b16 %v1260, %v1260
      %v1325 = vpack.c.b16 %v1261, %v1261
      %v1326 = vpack.c.b16 %v1262, %v1262
      %v1327 = vpack.c.b16 %v1263, %v1263
      %v1328 = vpack.c.b16 %v1264, %v1264
      %v1329 = vpack.c.b16 %v1265, %v1265
      %v1330 = vpack.c.b16 %v1266, %v1266
      %v1331 = vpack.c.b16 %v1267, %v1267
      %v1332 = vpack.c.b16 %v1268, %v1268
      %v1333 = vpack.c.b16 %v1269, %v1269
      %v1334 = vpack.c.b16 %v1270, %v1270
      %v1335 = vpack.c.b16 %v1271, %v1271
      %v1336 = vpack.c.b16 %v1272, %v1272
      %v1337 = vpack.c.b16 %v1273, %v1273
      %v1338 = vpack.c.b16 %v1274, %v1274
      %v1339 = vpack.c.b16 %v1275, %v1275
      %v1340 = vpack.c.b16 %v1276, %v1276
      %v1341 = vpack.c.b16 %v1277, %v1277
      %v1342 = vpack.c.b16 %v1278, %v1278
      %v1343 = vpack.c.b16 %v1279, %v1279
      %v1344 = vpack.c.b16 %v1280, %v1280
      %v1345 = vpack.c.b16 %v1281, %v1281
      %v1346 = vpack.c.b16 %v1282, %v1282
      %v1347 = vpack.c.b16 %v1283, %v1283
      %v1348 = vpack.c.b16 %v1284, %v1284
      %v1349 = vpack.c.b16 %v1285, %v1285
      %v1350 = vpack.c.b16 %v1286, %v1286
      %v1351 = vpack.c.b16 %v1287, %v1287
      %v1352 = vpack.c.b16 %v1288, %v1288
      %v1353 = vpack.c.b16 %v1289, %v1289
      %v1354 = vpack.c.b16 %v1290, %v1290
      %v1355 = vpack.c.b16 %v1291, %v1291
      %v1356 = vpack.c.b16 %v1292, %v1292
      %v1357 = vpack.c.b16 %v1293, %v1293
      %v1358 = vpack.c.b16 %v1294, %v1294
      %v1359 = vpack.c.b16 %v1295, %v1295
      %v1360 = vpack.c.b16 %v1296, %v1296
      %v1361 = vpack.c.b16 %v1297, %v1297
      %v1362 = vpack.c.b16 %v1298, %v1298
      %v1363 = vpack.c.b16 %v1299, %v1299
      %v1364 = vpack.c.b16 %v1300, %v1300
      %v1365 = vpack.c.b16 %v1301, %v1301
      %v1366 = vpack.c.b16 %v1302, %v1302
      %v1367 = vpack.c.b16 %v1303, %v1303
      %v1368 = vpack.c.b16 %v1304, %v1304
      %v1369 = vpack.c.b16 %v1305, %v1305
      %v1370 = vpack.c.b16 %v1306, %v1306
      %v1371 = vpack.c.b16 %v1307, %v1307
      %v1372 = vpack.c.b16 %v1308, %v1308
      %v1373 = vpack.c.b16 %v1309, %v1309
      %v1374 = vpack.c.b16 %v1310, %v1310
      %v1375 = vpack.c.b16 %v1311, %v1311
      %v1376 = vpack.c.b16 %v1312, %v1312
      %v1377 = vpack.c.b16 %v1313, %v1313
      %v1378 = vpack.c.b16 %v1314, %v1314
      %v1379 = vpack.c.b16 %v1315, %v1315
      %v1380 = vpack.c.b16 %v1316, %v1316
      %1445 = vst [vmem:[#allocation8] sm:$0xf] %v1317
      %1446 = vst [vmem:[#allocation8 + $0x4] sm:$0xf] %v1318
      %1447 = vst [vmem:[#allocation8 + $0x8] sm:$0xf] %v1319
      %1448 = vst [vmem:[#allocation8 + $0xc] sm:$0xf] %v1320
      %1449 = vst [vmem:[#allocation8 + $0x10] sm:$0xf] %v1321
      %1450 = vst [vmem:[#allocation8 + $0x14] sm:$0xf] %v1322
      %1451 = vst [vmem:[#allocation8 + $0x18] sm:$0xf] %v1323
      %1452 = vst [vmem:[#allocation8 + $0x1c] sm:$0xf] %v1324
      %1453 = vst [vmem:[#allocation8 + $0x20] sm:$0xf] %v1325
      %1454 = vst [vmem:[#allocation8 + $0x24] sm:$0xf] %v1326
      %1455 = vst [vmem:[#allocation8 + $0x28] sm:$0xf] %v1327
      %1456 = vst [vmem:[#allocation8 + $0x2c] sm:$0xf] %v1328
      %1457 = vst [vmem:[#allocation8 + $0x30] sm:$0xf] %v1329
      %1458 = vst [vmem:[#allocation8 + $0x34] sm:$0xf] %v1330
      %1459 = vst [vmem:[#allocation8 + $0x38] sm:$0xf] %v1331
      %1460 = vst [vmem:[#allocation8 + $0x3c] sm:$0xf] %v1332
      %1461 = vst [vmem:[#allocation8 + $0x40] sm:$0xf] %v1333
      %1462 = vst [vmem:[#allocation8 + $0x44] sm:$0xf] %v1334
      %1463 = vst [vmem:[#allocation8 + $0x48] sm:$0xf] %v1335
      %1464 = vst [vmem:[#allocation8 + $0x4c] sm:$0xf] %v1336
      %1465 = vst [vmem:[#allocation8 + $0x50] sm:$0xf] %v1337
      %1466 = vst [vmem:[#allocation8 + $0x54] sm:$0xf] %v1338
      %1467 = vst [vmem:[#allocation8 + $0x58] sm:$0xf] %v1339
      %1468 = vst [vmem:[#allocation8 + $0x5c] sm:$0xf] %v1340
      %1469 = vst [vmem:[#allocation8 + $0x60] sm:$0xf] %v1341
      %1470 = vst [vmem:[#allocation8 + $0x64] sm:$0xf] %v1342
      %1471 = vst [vmem:[#allocation8 + $0x68] sm:$0xf] %v1343
      %1472 = vst [vmem:[#allocation8 + $0x6c] sm:$0xf] %v1344
      %1473 = vst [vmem:[#allocation8 + $0x70] sm:$0xf] %v1345
      %1474 = vst [vmem:[#allocation8 + $0x74] sm:$0xf] %v1346
      %1475 = vst [vmem:[#allocation8 + $0x78] sm:$0xf] %v1347
      %1476 = vst [vmem:[#allocation8 + $0x7c] sm:$0xf] %v1348
      %1477 = vst [vmem:[#allocation8 + $0x80] sm:$0xf] %v1349
      %1478 = vst [vmem:[#allocation8 + $0x84] sm:$0xf] %v1350
      %1479 = vst [vmem:[#allocation8 + $0x88] sm:$0xf] %v1351
      %1480 = vst [vmem:[#allocation8 + $0x8c] sm:$0xf] %v1352
      %1481 = vst [vmem:[#allocation8 + $0x90] sm:$0xf] %v1353
      %1482 = vst [vmem:[#allocation8 + $0x94] sm:$0xf] %v1354
      %1483 = vst [vmem:[#allocation8 + $0x98] sm:$0xf] %v1355
      %1484 = vst [vmem:[#allocation8 + $0x9c] sm:$0xf] %v1356
      %1485 = vst [vmem:[#allocation8 + $0xa0] sm:$0xf] %v1357
      %1486 = vst [vmem:[#allocation8 + $0xa4] sm:$0xf] %v1358
      %1487 = vst [vmem:[#allocation8 + $0xa8] sm:$0xf] %v1359
      %1488 = vst [vmem:[#allocation8 + $0xac] sm:$0xf] %v1360
      %1489 = vst [vmem:[#allocation8 + $0xb0] sm:$0xf] %v1361
      %1490 = vst [vmem:[#allocation8 + $0xb4] sm:$0xf] %v1362
      %1491 = vst [vmem:[#allocation8 + $0xb8] sm:$0xf] %v1363
      %1492 = vst [vmem:[#allocation8 + $0xbc] sm:$0xf] %v1364
      %1493 = vst [vmem:[#allocation8 + $0xc0] sm:$0xf] %v1365
      %1494 = vst [vmem:[#allocation8 + $0xc4] sm:$0xf] %v1366
      %1495 = vst [vmem:[#allocation8 + $0xc8] sm:$0xf] %v1367
      %1496 = vst [vmem:[#allocation8 + $0xcc] sm:$0xf] %v1368
      %1497 = vst [vmem:[#allocation8 + $0xd0] sm:$0xf] %v1369
      %1498 = vst [vmem:[#allocation8 + $0xd4] sm:$0xf] %v1370
      %1499 = vst [vmem:[#allocation8 + $0xd8] sm:$0xf] %v1371
      %1500 = vst [vmem:[#allocation8 + $0xdc] sm:$0xf] %v1372
      %1501 = vst [vmem:[#allocation8 + $0xe0] sm:$0xf] %v1373
      %1502 = vst [vmem:[#allocation8 + $0xe4] sm:$0xf] %v1374
      %1503 = vst [vmem:[#allocation8 + $0xe8] sm:$0xf] %v1375
      %1504 = vst [vmem:[#allocation8 + $0xec] sm:$0xf] %v1376
      %1505 = vst [vmem:[#allocation8 + $0xf0] sm:$0xf] %v1377
      %1506 = vst [vmem:[#allocation8 + $0xf4] sm:$0xf] %v1378
      %1507 = vst [vmem:[#allocation8 + $0xf8] sm:$0xf] %v1379
      %1508 = vst [vmem:[#allocation8 + $0xfc] sm:$0xf] %v1380
    $region33: #{_conv_call.1} parent=1 // pred_fallthru
      _
    // Predicated region
    $region34: #{_conv_call.1} parent=1 // pred_check
      _
    $region35: #{_conv_call.1} parent=1 // pred_check_branch
      %1510 = sbr.rel (0) target = $region37
    $region36: #{_conv_call.1} parent=1 // pred_region
      %s1512 = ssub.s32 4096, 4096
      %1513 = vsyncadd [#allocation5], %s1512
      %s1514 = sshll.u32 [#allocation8], 4
      %s1515 = int_to_ptr.vmem [resolvable:$true] %s1514
      %1520 = dma.vmem_to_hbm [thread:$0]  %s1515, 4096, %s4, [#allocation5], 64, 64, 4
    $region37: #{_conv_call.1} parent=1 // pred_fallthru
      _
    // Predicated region
    $region38: #{_conv_call.1} parent=1 // pred_check
      _
    $region39: #{_conv_call.1} parent=1 // pred_check_branch
      %1522 = sbr.rel (0) target = $region41
    $region40: #{_conv_call.1} parent=1 // pred_region
      %1523 = dma.done [#allocation5], 4096
    $region41: #{_conv_call.1} parent=1 // pred_fallthru
      _
    %1524 = vsyncpa [#allocation4], 1
    %1525 = vsyncpa [#allocation7], 1
    %1526 = vsyncpa [#allocation5], 1

</llo_original>
